<compile_context>
chip_gen: v7x
topology: tpu7x:2x2x1
jax: 0.10.0
libtpu: 0.0.40
codegen_flags: <defaults>
</compile_context>

<pallas_src>
import jax
import jax.numpy as jnp
from jax import lax
from jax.experimental import pallas as pl
from jax.experimental.pallas import tpu as pltpu


# ----------------------------- configuration --------------------------------
NUM_NODES = 16
RNN_UNITS = 32
OUTPUT_DIM = 2
NUM_RNN_LAYERS = 2
MAX_DIFFUSION_STEP = 2            # K
BATCH = 2
HORIZON = 8                       # decode steps fused into one pallas_call
HIDDEN_STATE_SIZE = NUM_NODES * RNN_UNITS


# ------------------------------ kernel helpers -------------------------------
def _fagru_cell(x, h, adj, w_ref, *, K, units, din):
    """One diffusion-GRU cell on batch-folded 2-D operands (VMEM/vregs only).

    x:     (M, din)                    M = batch * num_nodes
    h:     (M, units)
    adj:   (M, M)                      block-diagonal support kron(I_B, A)
    w_ref: ((K+1)*(din+units) + 1, 3*units) packed [Wg | Wc] rows (torch gconv
           layout) with a trailing [bg | bc] bias row.
    """
    f32 = jnp.float32
    in_sz = (K + 1) * (din + units)

    # Joint diffusion of [x | h]: one adj matmul per diffusion step.
    zs = [jnp.concatenate([x, h], axis=1)]
    for _ in range(K):
        zs.append(jnp.dot(adj, zs[-1], preferred_element_type=f32))

    # Gate gconv == ONE matmul against the torch-layout weight.
    gate_in = jnp.concatenate(zs, axis=1) if K > 0 else zs[0]
    gate = jax.nn.sigmoid(
        jnp.dot(gate_in, w_ref[:in_sz, :2 * units], preferred_element_type=f32)
        + w_ref[in_sz:in_sz + 1, :2 * units])
    r = gate[:, :units]
    u = gate[:, units:]

    # Candidate gconv: reuse the diffused x half, swap in the diffused r*h half.
    rhs = [r * h]
    for _ in range(K):
        rhs.append(jnp.dot(adj, rhs[-1], preferred_element_type=f32))
    cand_in = jnp.concatenate(
        [jnp.concatenate([zs[k][:, :din], rhs[k]], axis=1) for k in range(K + 1)],
        axis=1)
    c = jnp.tanh(
        jnp.dot(cand_in, w_ref[:in_sz, 2 * units:], preferred_element_type=f32)
        + w_ref[in_sz:in_sz + 1, 2 * units:])

    return u * h + (1.0 - u) * c


def _make_decoder_kernel(K, units, dins):
    """One decoder step (all FAGRU layers + projection); hidden state is carried
    across the grid=(T,) horizon in VMEM scratch."""
    num_layers = len(dins)

    def kernel(*refs):
        x_ref, h0_ref, adj_ref = refs[:3]
        w_refs = refs[3:3 + num_layers]
        wp_ref = refs[3 + num_layers]
        out_ref = refs[4 + num_layers]
        hT_ref = refs[5 + num_layers]
        h_scr = refs[6 + num_layers]

        t = pl.program_id(0)

        # Hidden state lives in VMEM scratch for the whole horizon.
        @pl.when(t == 0)
        def _init():
            h_scr[...] = h0_ref[...]

        adj = adj_ref[...]
        inp = x_ref[0]                                   # (M, output_dim)
        for l in range(num_layers):
            h_new = _fagru_cell(inp, h_scr[l], adj, w_refs[l],
                                K=K, units=units, din=dins[l])
            h_scr[l] = h_new
            inp = h_new

        # Final linear projection (batch already folded into sublanes).
        out_ref[0] = (jnp.dot(inp, wp_ref[:units, :],
                              preferred_element_type=jnp.float32)
                      + wp_ref[units:units + 1, :]).astype(out_ref.dtype)

        # Hidden state goes back to HBM exactly once, on the last step.
        @pl.when(t == pl.num_programs(0) - 1)
        def _finalize():
            hT_ref[...] = h_scr[...]

    return kernel


def _cost_estimate(T, M, dins, K, units, out_dim, n_bytes):
    flops = 0
    trans = 0
    for din in dins:
        in_sz = (K + 1) * (din + units)
        flops += 2 * K * M * M * (din + units)      # joint [x|h] diffusion
        flops += 2 * K * M * M * units              # r*h diffusion
        flops += 2 * M * in_sz * 3 * units          # gate (2U) + candidate (U)
        trans += M * 3 * units                      # sigmoid(2U) + tanh(U)
    flops += 2 * M * units * out_dim                # projection
    return pl.CostEstimate(flops=T * flops, transcendentals=T * trans,
                           bytes_accessed=n_bytes)


# ------------------------------ parameter init -------------------------------
def init_params(key):
    """Deterministic synthetic parameters (shapes match the nn.Module)."""
    params = {"layers": []}
    num_mat = MAX_DIFFUSION_STEP + 1
    for layer in range(NUM_RNN_LAYERS):
        din = OUTPUT_DIM if layer == 0 else RNN_UNITS
        in_sz = (din + RNN_UNITS) * num_mat
        key, k1, k2 = jax.random.split(key, 3)
        wg = jax.random.normal(k1, (in_sz, 2 * RNN_UNITS), jnp.float32) * 0.05
        bg = jnp.ones((1, 2 * RNN_UNITS), jnp.float32)   # bias_start=1.0 (gates)
        wc = jax.random.normal(k2, (in_sz, RNN_UNITS), jnp.float32) * 0.05
        bc = jnp.zeros((1, RNN_UNITS), jnp.float32)
        params["layers"].append((wg, bg, wc, bc))
    key, kp = jax.random.split(key)
    params["W_proj"] = jax.random.normal(kp, (RNN_UNITS, OUTPUT_DIM),
                                         jnp.float32) * 0.05
    params["b_proj"] = jnp.zeros((1, OUTPUT_DIM), jnp.float32)
    return params


# -------------------------- one-time (per-model) prep -------------------------
def prepare_decoder(params, adj, batch):
    """Step-invariant prep hoisted out of the decode loop: block-diagonal
    support and lane-dense per-layer weight packs (computed once)."""
    adj_bd = jnp.kron(jnp.eye(batch, dtype=adj.dtype), adj)   # (B*N, B*N)
    w_packs = []
    for (wg, bg, wc, bc) in params["layers"]:
        w_packs.append(jnp.concatenate(
            [jnp.concatenate([wg, wc], axis=1),
             jnp.concatenate([bg, bc], axis=1)], axis=0))      # (in_sz+1, 3U)
    wp_pack = jnp.concatenate([params["W_proj"], params["b_proj"]], axis=0)
    return {"adj_bd": adj_bd, "w_packs": tuple(w_packs), "wp_pack": wp_pack}


# ------------------------------ forward passes --------------------------------
@jax.jit
def decoder_rollout(prep, inputs_seq, hidden_state):
    """Fused decode horizon: one pallas_call, grid=(T,).

    inputs_seq:   (T, B, num_nodes * output_dim)
    hidden_state: (num_layers, B, num_nodes * rnn_units)
    returns: outputs (T, B, num_nodes * output_dim),
             final hidden (num_layers, B, num_nodes * rnn_units)
    """
    T, B = inputs_seq.shape[:2]
    M = B * NUM_NODES
    L, U, K = NUM_RNN_LAYERS, RNN_UNITS, MAX_DIFFUSION_STEP

    # Batch folded into the sublane (M) dim; contiguous reshapes are free.
    x_seq = inputs_seq.reshape(T, M, OUTPUT_DIM)
    h0 = hidden_state.reshape(L, M, U)

    adj_bd = prep["adj_bd"]
    w_packs = prep["w_packs"]
    wp_pack = prep["wp_pack"]
    dins = tuple((w.shape[0] - 1) // (K + 1) - U for w in w_packs)

    def _const(shape):
        # Constant block index => operand DMA'd once, stays resident in VMEM.
        return pl.BlockSpec(shape, lambda t, _s=shape: (0,) * len(_s))

    in_specs = ([pl.BlockSpec((1, M, OUTPUT_DIM), lambda t: (t, 0, 0)),
                 _const((L, M, U)),
                 _const(adj_bd.shape)]
                + [_const(w.shape) for w in w_packs]
                + [_const(wp_pack.shape)])
    out_specs = (pl.BlockSpec((1, M, OUTPUT_DIM), lambda t: (t, 0, 0)),
                 _const((L, M, U)))
    out_shape = (jax.ShapeDtypeStruct((T, M, OUTPUT_DIM), jnp.float32),
                 jax.ShapeDtypeStruct((L, M, U), jnp.float32))

    n_bytes = 4 * (x_seq.size + 2 * h0.size + adj_bd.size + wp_pack.size
                   + sum(int(w.size) for w in w_packs) + T * M * OUTPUT_DIM)

    out_seq, h_final = pl.pallas_call(
        _make_decoder_kernel(K, U, dins),
        out_shape=out_shape,
        grid=(T,),
        in_specs=in_specs,
        out_specs=out_specs,
        scratch_shapes=[pltpu.VMEM((L, M, U), jnp.float32)],
        input_output_aliases={1: 1},      # hidden-state in -> final hidden out
        compiler_params=pltpu.CompilerParams(dimension_semantics=("arbitrary",)),
        cost_estimate=_cost_estimate(T, M, dins, K, U, OUTPUT_DIM, n_bytes),
    )(x_seq, h0, adj_bd, *w_packs, wp_pack)

    return (out_seq.reshape(T, B, NUM_NODES * OUTPUT_DIM),
            h_final.reshape(L, B, HIDDEN_STATE_SIZE))


def decoder_forward(prep, inputs, hidden_state=None):
    """Module-equivalent single decoder step (a T=1 instance of the fused
    kernel): inputs (B, N*output_dim) -> (output, new hidden_state)."""
    if hidden_state is None:
        hidden_state = jnp.zeros(
            (NUM_RNN_LAYERS, inputs.shape[0], HIDDEN_STATE_SIZE), jnp.float32)
    out_seq, h_final = decoder_rollout(prep, inputs[None], hidden_state)
    return out_seq[0], h_final


# -------------------------- pure-JAX reference (no Pallas) --------------------
def _reference_gconv(inp, state, adj, w, b, K):
    z = jnp.concatenate([inp, state], axis=-1)              # (B, N, din+U)
    zs = [z]
    for _ in range(K):
        zs.append(jnp.einsum("nm,bmf->bnf", adj, zs[-1],
                             precision=lax.Precision.HIGHEST))
    cat = jnp.concatenate(zs, axis=-1)                       # (B, N, (K+1)(din+U))
    return jnp.einsum("bnf,fo->bno", cat, w,
                      precision=lax.Precision.HIGHEST) + b


@jax.jit
def reference_forward(params, adj, inputs, hidden_state):
    """Pure-JAX reference of the assumed DCGRU/FAGRU decoder-step semantics."""
    B = inputs.shape[0]
    x = inputs.reshape(B, NUM_NODES, OUTPUT_DIM)
    h = hidden_state.reshape(NUM_RNN_LAYERS, B, NUM_NODES, RNN_UNITS)
    out, new_h = x, []
    for l in range(NUM_RNN_LAYERS):
        wg, bg, wc, bc = params["layers"][l]
        gates = jax.nn.sigmoid(
            _reference_gconv(out, h[l], adj, wg, bg, MAX_DIFFUSION_STEP))
        r, u = gates[..., :RNN_UNITS], gates[..., RNN_UNITS:]
        c = jnp.tanh(
            _reference_gconv(out, r * h[l], adj, wc, bc, MAX_DIFFUSION_STEP))
        hn = u * h[l] + (1.0 - u) * c
        new_h.append(hn)
        out = hn
    proj = jnp.dot(out.reshape(-1, RNN_UNITS), params["W_proj"],
                   precision=lax.Precision.HIGHEST) + params["b_proj"]
    return (proj.reshape(B, NUM_NODES * OUTPUT_DIM),
            jnp.stack(new_h).reshape(NUM_RNN_LAYERS, B, HIDDEN_STATE_SIZE))


# ---------------------------------- main --------------------------------------
if __name__ == "__main__":
    key = jax.random.PRNGKey(0)
    key, k_in, k_adj, k_h = jax.random.split(key, 4)

    params = init_params(key)
    inputs_seq = jax.random.normal(
        k_in, (HORIZON, BATCH, NUM_NODES * OUTPUT_DIM), jnp.float32)
    adj = jax.nn.softmax(
        jax.random.normal(k_adj, (NUM_NODES, NUM_NODES), jnp.float32), axis=-1)
    hidden0 = 0.1 * jax.random.normal(
        k_h, (NUM_RNN_LAYERS, BATCH, HIDDEN_STATE_SIZE), jnp.float32)

    # One-time prep (hoisted out of the decode loop).
    prep = prepare_decoder(params, adj, BATCH)

    # Fused horizon: a single pallas_call covers all HORIZON decoder steps.
    out_seq, h_T = jax.block_until_ready(
        decoder_rollout(prep, inputs_seq, hidden0))

    assert out_seq.shape == (HORIZON, BATCH, NUM_NODES * OUTPUT_DIM)
    assert h_T.shape == (NUM_RNN_LAYERS, BATCH, HIDDEN_STATE_SIZE)
    assert bool(jnp.all(jnp.isfinite(out_seq))) and bool(jnp.all(jnp.isfinite(h_T)))

    # Cross-check: per-step kernel path (module-equivalent forward) and the
    # pure-JAX reference must agree with the fused rollout.
    h_step, h_ref = hidden0, hidden0
    max_err = 0.0
    for t in range(HORIZON):
        o_step, h_step = decoder_forward(prep, inputs_seq[t], h_step)
        o_ref, h_ref = reference_forward(params, adj, inputs_seq[t], h_ref)
        max_err = max(
            max_err,
            float(jnp.max(jnp.abs(o_step - out_seq[t]))),
            float(jnp.max(jnp.abs(o_step - o_ref))),
            float(jnp.max(jnp.abs(h_step - h_ref))))
    max_err = max(max_err, float(jnp.max(jnp.abs(h_step - h_T))))
    assert max_err < 5e-3, f"kernel mismatch, max abs err = {max_err}"

    print("KERNEL_OK")
</pallas_src>

<mosaic_0001>
module attributes {stable_mosaic.version = 11 : i64} {
  func.func @kernel(%arg0: i32, %arg1: memref<1x32x2xf32, #tpu.memory_space<vmem>>, %arg2: memref<2x32x32xf32, #tpu.memory_space<vmem>>, %arg3: memref<32x32xf32, #tpu.memory_space<vmem>>, %arg4: memref<103x96xf32, #tpu.memory_space<vmem>>, %arg5: memref<193x96xf32, #tpu.memory_space<vmem>>, %arg6: memref<33x2xf32, #tpu.memory_space<vmem>>, %arg7: memref<1x32x2xf32, #tpu.memory_space<vmem>>, %arg8: memref<2x32x32xf32, #tpu.memory_space<vmem>>, %arg9: memref<2x32x32xf32, #tpu.memory_space<vmem>>) attributes {dimension_semantics = [#tpu.dimension_semantics<arbitrary>], iteration_bounds = array<i64: 8>, scalar_prefetch = 0 : i64, scratch_operands = 1 : i64, tpu.core_type = #tpu.core_type<tc>, window_params = [{transform_indices = @transform_0, window_bounds = array<i64: 1, 32, 2>}, {pipeline_mode = #tpu.pipeline_mode<synchronous>, transform_indices = @transform_1, window_bounds = array<i64: 2, 32, 32>}, {pipeline_mode = #tpu.pipeline_mode<synchronous>, transform_indices = @transform_2, window_bounds = array<i64: 32, 32>}, {pipeline_mode = #tpu.pipeline_mode<synchronous>, transform_indices = @transform_3, window_bounds = array<i64: 103, 96>}, {pipeline_mode = #tpu.pipeline_mode<synchronous>, transform_indices = @transform_4, window_bounds = array<i64: 193, 96>}, {pipeline_mode = #tpu.pipeline_mode<synchronous>, transform_indices = @transform_5, window_bounds = array<i64: 33, 2>}, {transform_indices = @transform_6, window_bounds = array<i64: 1, 32, 2>}, {pipeline_mode = #tpu.pipeline_mode<synchronous>, transform_indices = @transform_7, window_bounds = array<i64: 2, 32, 32>}]} {
    %c0_i32 = arith.constant 0 : i32
    %0 = arith.cmpi eq, %arg0, %c0_i32 : i32
    %1 = arith.extui %0 : i1 to i32
    %c0_i32_0 = arith.constant 0 : i32
    %2 = arith.cmpi ne, %1, %c0_i32_0 : i32
    scf.if %2 {
      %c0_52 = arith.constant 0 : index
      %c0_53 = arith.constant 0 : index
      %c0_54 = arith.constant 0 : index
      %101 = vector.load %arg2[%c0_52, %c0_53, %c0_54] : memref<2x32x32xf32, #tpu.memory_space<vmem>>, vector<2x32x32xf32>
      %c0_55 = arith.constant 0 : index
      %c0_56 = arith.constant 0 : index
      %c0_57 = arith.constant 0 : index
      %102 = vector.load %arg9[%c0_55, %c0_56, %c0_57] : memref<2x32x32xf32, #tpu.memory_space<vmem>>, vector<2x32x32xf32>
      tpu.vector_store %arg9[%c0_55, %c0_56, %c0_57], %101 {strides = array<i32>} : memref<2x32x32xf32, #tpu.memory_space<vmem>>, vector<2x32x32xf32>,
    } else {
    }
    %c0 = arith.constant 0 : index
    %c0_1 = arith.constant 0 : index
    %3 = vector.load %arg3[%c0, %c0_1] : memref<32x32xf32, #tpu.memory_space<vmem>>, vector<32x32xf32>
    %c0_2 = arith.constant 0 : index
    %c0_3 = arith.constant 0 : index
    %c0_4 = arith.constant 0 : index
    %4 = vector.load %arg1[%c0_2, %c0_3, %c0_4] : memref<1x32x2xf32, #tpu.memory_space<vmem>>, vector<1x32x2xf32>
    %5 = vector.shape_cast %4 : vector<1x32x2xf32> to vector<32x2xf32>
    %c0_5 = arith.constant 0 : index
    %c0_6 = arith.constant 0 : index
    %c0_7 = arith.constant 0 : index
    %6 = vector.load %arg9[%c0_5, %c0_6, %c0_7] : memref<2x32x32xf32, #tpu.memory_space<vmem>>, vector<1x32x32xf32>
    %7 = vector.shape_cast %6 : vector<1x32x32xf32> to vector<32x32xf32>
    %8 = tpu.concatenate %5, %7 in 1 : vector<32x2xf32>, vector<32x32xf32> -> vector<32x34xf32>
    %cst = arith.constant dense<0.000000e+00> : vector<32x34xf32>
    %9 = tpu.matmul %3, %8, %cst {dimension_numbers = #tpu.dot_dimension_numbers<[1], [0], [0], [1], [0, 0, 1, 1], [], []>} : vector<32x32xf32>, vector<32x34xf32>, vector<32x34xf32> -> vector<32x34xf32>
    %cst_8 = arith.constant dense<0.000000e+00> : vector<32x34xf32>
    %10 = tpu.matmul %3, %9, %cst_8 {dimension_numbers = #tpu.dot_dimension_numbers<[1], [0], [0], [1], [0, 0, 1, 1], [], []>} : vector<32x32xf32>, vector<32x34xf32>, vector<32x34xf32> -> vector<32x34xf32>
    %11 = tpu.concatenate %8, %9, %10 in 1 : vector<32x34xf32>, vector<32x34xf32>, vector<32x34xf32> -> vector<32x102xf32>
    %c0_9 = arith.constant 0 : index
    %c0_10 = arith.constant 0 : index
    %12 = vector.load %arg4[%c0_9, %c0_10] : memref<103x96xf32, #tpu.memory_space<vmem>>, vector<102x64xf32>
    %cst_11 = arith.constant dense<0.000000e+00> : vector<32x64xf32>
    %13 = tpu.matmul %11, %12, %cst_11 {dimension_numbers = #tpu.dot_dimension_numbers<[1], [0], [0], [1], [0, 0, 1, 1], [], []>} : vector<32x102xf32>, vector<102x64xf32>, vector<32x64xf32> -> vector<32x64xf32>
    %c102 = arith.constant 102 : index
    %c0_12 = arith.constant 0 : index
    %14 = vector.load %arg4[%c102, %c0_12] : memref<103x96xf32, #tpu.memory_space<vmem>>, vector<1x64xf32>
    %15 = vector.broadcast %14 : vector<1x64xf32> to vector<32x64xf32>
    %16 = arith.addf %13, %15 : vector<32x64xf32>
    %17 = arith.negf %16 : vector<32x64xf32>
    %18 = math.exp %17 : vector<32x64xf32>
    %cst_13 = arith.constant 1.000000e+00 : f32
    %19 = vector.broadcast %cst_13 : f32 to vector<32x64xf32>
    %20 = arith.addf %19, %18 : vector<32x64xf32>
    %21 = arith.divf %19, %20 : vector<32x64xf32>
    %22 = vector.extract_strided_slice %21 {offsets = [0, 0], sizes = [32, 32], strides = [1, 1]} : vector<32x64xf32> to vector<32x32xf32>
    %23 = vector.extract_strided_slice %21 {offsets = [0, 32], sizes = [32, 32], strides = [1, 1]} : vector<32x64xf32> to vector<32x32xf32>
    %24 = arith.mulf %22, %7 : vector<32x32xf32>
    %cst_14 = arith.constant dense<0.000000e+00> : vector<32x32xf32>
    %25 = tpu.matmul %3, %24, %cst_14 {dimension_numbers = #tpu.dot_dimension_numbers<[1], [0], [0], [1], [0, 0, 1, 1], [], []>} : vector<32x32xf32>, vector<32x32xf32>, vector<32x32xf32> -> vector<32x32xf32>
    %cst_15 = arith.constant dense<0.000000e+00> : vector<32x32xf32>
    %26 = tpu.matmul %3, %25, %cst_15 {dimension_numbers = #tpu.dot_dimension_numbers<[1], [0], [0], [1], [0, 0, 1, 1], [], []>} : vector<32x32xf32>, vector<32x32xf32>, vector<32x32xf32> -> vector<32x32xf32>
    %27 = vector.extract_strided_slice %8 {offsets = [0, 0], sizes = [32, 2], strides = [1, 1]} : vector<32x34xf32> to vector<32x2xf32>
    %28 = tpu.concatenate %27, %24 in 1 : vector<32x2xf32>, vector<32x32xf32> -> vector<32x34xf32>
    %29 = vector.extract_strided_slice %9 {offsets = [0, 0], sizes = [32, 2], strides = [1, 1]} : vector<32x34xf32> to vector<32x2xf32>
    %30 = tpu.concatenate %29, %25 in 1 : vector<32x2xf32>, vector<32x32xf32> -> vector<32x34xf32>
    %31 = vector.extract_strided_slice %10 {offsets = [0, 0], sizes = [32, 2], strides = [1, 1]} : vector<32x34xf32> to vector<32x2xf32>
    %32 = tpu.concatenate %31, %26 in 1 : vector<32x2xf32>, vector<32x32xf32> -> vector<32x34xf32>
    %33 = tpu.concatenate %28, %30, %32 in 1 : vector<32x34xf32>, vector<32x34xf32>, vector<32x34xf32> -> vector<32x102xf32>
    %c0_16 = arith.constant 0 : index
    %c64 = arith.constant 64 : index
    %34 = vector.load %arg4[%c0_16, %c64] : memref<103x96xf32, #tpu.memory_space<vmem>>, vector<102x32xf32>
    %cst_17 = arith.constant dense<0.000000e+00> : vector<32x32xf32>
    %35 = tpu.matmul %33, %34, %cst_17 {dimension_numbers = #tpu.dot_dimension_numbers<[1], [0], [0], [1], [0, 0, 1, 1], [], []>} : vector<32x102xf32>, vector<102x32xf32>, vector<32x32xf32> -> vector<32x32xf32>
    %c102_18 = arith.constant 102 : index
    %c64_19 = arith.constant 64 : index
    %36 = vector.load %arg4[%c102_18, %c64_19] : memref<103x96xf32, #tpu.memory_space<vmem>>, vector<1x32xf32>
    %37 = vector.broadcast %36 : vector<1x32xf32> to vector<32x32xf32>
    %38 = arith.addf %35, %37 : vector<32x32xf32>
    %39 = math.tanh %38 : vector<32x32xf32>
    %40 = arith.mulf %23, %7 : vector<32x32xf32>
    %cst_20 = arith.constant 1.000000e+00 : f32
    %41 = vector.broadcast %cst_20 : f32 to vector<32x32xf32>
    %42 = arith.subf %41, %23 : vector<32x32xf32>
    %43 = arith.mulf %42, %39 : vector<32x32xf32>
    %44 = arith.addf %40, %43 : vector<32x32xf32>
    %c0_21 = arith.constant 0 : index
    %c0_22 = arith.constant 0 : index
    %c0_23 = arith.constant 0 : index
    %45 = vector.load %arg9[%c0_21, %c0_22, %c0_23] : memref<2x32x32xf32, #tpu.memory_space<vmem>>, vector<1x32x32xf32>
    %46 = vector.shape_cast %45 : vector<1x32x32xf32> to vector<32x32xf32>
    %47 = vector.shape_cast %44 : vector<32x32xf32> to vector<1x32x32xf32>
    tpu.vector_store %arg9[%c0_21, %c0_22, %c0_23], %47 {strides = array<i32>} : memref<2x32x32xf32, #tpu.memory_space<vmem>>, vector<1x32x32xf32>,
    %c1 = arith.constant 1 : index
    %c0_24 = arith.constant 0 : index
    %c0_25 = arith.constant 0 : index
    %48 = vector.load %arg9[%c1, %c0_24, %c0_25] : memref<2x32x32xf32, #tpu.memory_space<vmem>>, vector<1x32x32xf32>
    %49 = vector.shape_cast %48 : vector<1x32x32xf32> to vector<32x32xf32>
    %50 = tpu.concatenate %44, %49 in 1 : vector<32x32xf32>, vector<32x32xf32> -> vector<32x64xf32>
    %cst_26 = arith.constant dense<0.000000e+00> : vector<32x64xf32>
    %51 = tpu.matmul %3, %50, %cst_26 {dimension_numbers = #tpu.dot_dimension_numbers<[1], [0], [0], [1], [0, 0, 1, 1], [], []>} : vector<32x32xf32>, vector<32x64xf32>, vector<32x64xf32> -> vector<32x64xf32>
    %cst_27 = arith.constant dense<0.000000e+00> : vector<32x64xf32>
    %52 = tpu.matmul %3, %51, %cst_27 {dimension_numbers = #tpu.dot_dimension_numbers<[1], [0], [0], [1], [0, 0, 1, 1], [], []>} : vector<32x32xf32>, vector<32x64xf32>, vector<32x64xf32> -> vector<32x64xf32>
    %53 = tpu.concatenate %50, %51, %52 in 1 : vector<32x64xf32>, vector<32x64xf32>, vector<32x64xf32> -> vector<32x192xf32>
    %c0_28 = arith.constant 0 : index
    %c0_29 = arith.constant 0 : index
    %54 = vector.load %arg5[%c0_28, %c0_29] : memref<193x96xf32, #tpu.memory_space<vmem>>, vector<192x64xf32>
    %cst_30 = arith.constant dense<0.000000e+00> : vector<32x64xf32>
    %55 = tpu.matmul %53, %54, %cst_30 {dimension_numbers = #tpu.dot_dimension_numbers<[1], [0], [0], [1], [0, 0, 1, 1], [], []>} : vector<32x192xf32>, vector<192x64xf32>, vector<32x64xf32> -> vector<32x64xf32>
    %c192 = arith.constant 192 : index
    %c0_31 = arith.constant 0 : index
    %56 = vector.load %arg5[%c192, %c0_31] : memref<193x96xf32, #tpu.memory_space<vmem>>, vector<1x64xf32>
    %57 = vector.broadcast %56 : vector<1x64xf32> to vector<32x64xf32>
    %58 = arith.addf %55, %57 : vector<32x64xf32>
    %59 = arith.negf %58 : vector<32x64xf32>
    %60 = math.exp %59 : vector<32x64xf32>
    %cst_32 = arith.constant 1.000000e+00 : f32
    %61 = vector.broadcast %cst_32 : f32 to vector<32x64xf32>
    %62 = arith.addf %61, %60 : vector<32x64xf32>
    %63 = arith.divf %61, %62 : vector<32x64xf32>
    %64 = vector.extract_strided_slice %63 {offsets = [0, 0], sizes = [32, 32], strides = [1, 1]} : vector<32x64xf32> to vector<32x32xf32>
    %65 = vector.extract_strided_slice %63 {offsets = [0, 32], sizes = [32, 32], strides = [1, 1]} : vector<32x64xf32> to vector<32x32xf32>
    %66 = arith.mulf %64, %49 : vector<32x32xf32>
    %cst_33 = arith.constant dense<0.000000e+00> : vector<32x32xf32>
    %67 = tpu.matmul %3, %66, %cst_33 {dimension_numbers = #tpu.dot_dimension_numbers<[1], [0], [0], [1], [0, 0, 1, 1], [], []>} : vector<32x32xf32>, vector<32x32xf32>, vector<32x32xf32> -> vector<32x32xf32>
    %cst_34 = arith.constant dense<0.000000e+00> : vector<32x32xf32>
    %68 = tpu.matmul %3, %67, %cst_34 {dimension_numbers = #tpu.dot_dimension_numbers<[1], [0], [0], [1], [0, 0, 1, 1], [], []>} : vector<32x32xf32>, vector<32x32xf32>, vector<32x32xf32> -> vector<32x32xf32>
    %69 = vector.extract_strided_slice %50 {offsets = [0, 0], sizes = [32, 32], strides = [1, 1]} : vector<32x64xf32> to vector<32x32xf32>
    %70 = tpu.concatenate %69, %66 in 1 : vector<32x32xf32>, vector<32x32xf32> -> vector<32x64xf32>
    %71 = vector.extract_strided_slice %51 {offsets = [0, 0], sizes = [32, 32], strides = [1, 1]} : vector<32x64xf32> to vector<32x32xf32>
    %72 = tpu.concatenate %71, %67 in 1 : vector<32x32xf32>, vector<32x32xf32> -> vector<32x64xf32>
    %73 = vector.extract_strided_slice %52 {offsets = [0, 0], sizes = [32, 32], strides = [1, 1]} : vector<32x64xf32> to vector<32x32xf32>
    %74 = tpu.concatenate %73, %68 in 1 : vector<32x32xf32>, vector<32x32xf32> -> vector<32x64xf32>
    %75 = tpu.concatenate %70, %72, %74 in 1 : vector<32x64xf32>, vector<32x64xf32>, vector<32x64xf32> -> vector<32x192xf32>
    %c0_35 = arith.constant 0 : index
    %c64_36 = arith.constant 64 : index
    %76 = vector.load %arg5[%c0_35, %c64_36] : memref<193x96xf32, #tpu.memory_space<vmem>>, vector<192x32xf32>
    %cst_37 = arith.constant dense<0.000000e+00> : vector<32x32xf32>
    %77 = tpu.matmul %75, %76, %cst_37 {dimension_numbers = #tpu.dot_dimension_numbers<[1], [0], [0], [1], [0, 0, 1, 1], [], []>} : vector<32x192xf32>, vector<192x32xf32>, vector<32x32xf32> -> vector<32x32xf32>
    %c192_38 = arith.constant 192 : index
    %c64_39 = arith.constant 64 : index
    %78 = vector.load %arg5[%c192_38, %c64_39] : memref<193x96xf32, #tpu.memory_space<vmem>>, vector<1x32xf32>
    %79 = vector.broadcast %78 : vector<1x32xf32> to vector<32x32xf32>
    %80 = arith.addf %77, %79 : vector<32x32xf32>
    %81 = math.tanh %80 : vector<32x32xf32>
    %82 = arith.mulf %65, %49 : vector<32x32xf32>
    %cst_40 = arith.constant 1.000000e+00 : f32
    %83 = vector.broadcast %cst_40 : f32 to vector<32x32xf32>
    %84 = arith.subf %83, %65 : vector<32x32xf32>
    %85 = arith.mulf %84, %81 : vector<32x32xf32>
    %86 = arith.addf %82, %85 : vector<32x32xf32>
    %c1_41 = arith.constant 1 : index
    %c0_42 = arith.constant 0 : index
    %c0_43 = arith.constant 0 : index
    %87 = vector.load %arg9[%c1_41, %c0_42, %c0_43] : memref<2x32x32xf32, #tpu.memory_space<vmem>>, vector<1x32x32xf32>
    %88 = vector.shape_cast %87 : vector<1x32x32xf32> to vector<32x32xf32>
    %89 = vector.shape_cast %86 : vector<32x32xf32> to vector<1x32x32xf32>
    tpu.vector_store %arg9[%c1_41, %c0_42, %c0_43], %89 {strides = array<i32>} : memref<2x32x32xf32, #tpu.memory_space<vmem>>, vector<1x32x32xf32>,
    %c0_44 = arith.constant 0 : index
    %c0_45 = arith.constant 0 : index
    %90 = vector.load %arg6[%c0_44, %c0_45] : memref<33x2xf32, #tpu.memory_space<vmem>>, vector<32x2xf32>
    %cst_46 = arith.constant dense<0.000000e+00> : vector<32x2xf32>
    %91 = tpu.matmul %86, %90, %cst_46 {dimension_numbers = #tpu.dot_dimension_numbers<[1], [0], [0], [1], [0, 0, 1, 1], [], []>} : vector<32x32xf32>, vector<32x2xf32>, vector<32x2xf32> -> vector<32x2xf32>
    %c32 = arith.constant 32 : index
    %c0_47 = arith.constant 0 : index
    %92 = vector.load %arg6[%c32, %c0_47] : memref<33x2xf32, #tpu.memory_space<vmem>>, vector<1x2xf32>
    %93 = vector.broadcast %92 : vector<1x2xf32> to vector<32x2xf32>
    %94 = arith.addf %91, %93 : vector<32x2xf32>
    %c0_48 = arith.constant 0 : index
    %c0_49 = arith.constant 0 : index
    %c0_50 = arith.constant 0 : index
    %95 = vector.load %arg7[%c0_48, %c0_49, %c0_50] : memref<1x32x2xf32, #tpu.memory_space<vmem>>, vector<1x32x2xf32>
    %96 = vector.shape_cast %95 : vector<1x32x2xf32> to vector<32x2xf32>
    %97 = vector.shape_cast %94 : vector<32x2xf32> to vector<1x32x2xf32>
    tpu.vector_store %arg7[%c0_48, %c0_49, %c0_50], %97 {strides = array<i32>} : memref<1x32x2xf32, #tpu.memory_space<vmem>>, vector<1x32x2xf32>,
    %c7_i32 = arith.constant 7 : i32
    %98 = arith.cmpi eq, %arg0, %c7_i32 : i32
    %99 = arith.extui %98 : i1 to i32
    %c0_i32_51 = arith.constant 0 : i32
    %100 = arith.cmpi ne, %99, %c0_i32_51 : i32
    scf.if %100 {
      %c0_52 = arith.constant 0 : index
      %c0_53 = arith.constant 0 : index
      %c0_54 = arith.constant 0 : index
      %101 = vector.load %arg9[%c0_52, %c0_53, %c0_54] : memref<2x32x32xf32, #tpu.memory_space<vmem>>, vector<2x32x32xf32>
      %c0_55 = arith.constant 0 : index
      %c0_56 = arith.constant 0 : index
      %c0_57 = arith.constant 0 : index
      %102 = vector.load %arg8[%c0_55, %c0_56, %c0_57] : memref<2x32x32xf32, #tpu.memory_space<vmem>>, vector<2x32x32xf32>
      tpu.vector_store %arg8[%c0_55, %c0_56, %c0_57], %101 {strides = array<i32>} : memref<2x32x32xf32, #tpu.memory_space<vmem>>, vector<2x32x32xf32>,
    } else {
    }
    return
  }
  func.func @transform_0(%arg0: i32) -> (i32, i32, i32) {
    %c0_i32 = arith.constant 0 : i32
    %c0_i32_0 = arith.constant 0 : i32
    %c0_i32_1 = arith.constant 0 : i32
    return %arg0, %c0_i32, %c0_i32_0 : i32, i32, i32
  }
  func.func @transform_1(%arg0: i32) -> (i32, i32, i32) {
    %c0_i32 = arith.constant 0 : i32
    %c0_i32_0 = arith.constant 0 : i32
    %c0_i32_1 = arith.constant 0 : i32
    %c0_i32_2 = arith.constant 0 : i32
    return %c0_i32, %c0_i32_0, %c0_i32_1 : i32, i32, i32
  }
  func.func @transform_2(%arg0: i32) -> (i32, i32) {
    %c0_i32 = arith.constant 0 : i32
    %c0_i32_0 = arith.constant 0 : i32
    %c0_i32_1 = arith.constant 0 : i32
    return %c0_i32, %c0_i32_0 : i32, i32
  }
  func.func @transform_3(%arg0: i32) -> (i32, i32) {
    %c0_i32 = arith.constant 0 : i32
    %c0_i32_0 = arith.constant 0 : i32
    %c0_i32_1 = arith.constant 0 : i32
    return %c0_i32, %c0_i32_0 : i32, i32
  }
  func.func @transform_4(%arg0: i32) -> (i32, i32) {
    %c0_i32 = arith.constant 0 : i32
    %c0_i32_0 = arith.constant 0 : i32
    %c0_i32_1 = arith.constant 0 : i32
    return %c0_i32, %c0_i32_0 : i32, i32
  }
  func.func @transform_5(%arg0: i32) -> (i32, i32) {
    %c0_i32 = arith.constant 0 : i32
    %c0_i32_0 = arith.constant 0 : i32
    %c0_i32_1 = arith.constant 0 : i32
    return %c0_i32, %c0_i32_0 : i32, i32
  }
  func.func @transform_6(%arg0: i32) -> (i32, i32, i32) {
    %c0_i32 = arith.constant 0 : i32
    %c0_i32_0 = arith.constant 0 : i32
    %c0_i32_1 = arith.constant 0 : i32
    return %arg0, %c0_i32, %c0_i32_0 : i32, i32, i32
  }
  func.func @transform_7(%arg0: i32) -> (i32, i32, i32) {
    %c0_i32 = arith.constant 0 : i32
    %c0_i32_0 = arith.constant 0 : i32
    %c0_i32_1 = arith.constant 0 : i32
    %c0_i32_2 = arith.constant 0 : i32
    return %c0_i32, %c0_i32_0, %c0_i32_1 : i32, i32, i32
  }
}

</mosaic_0001>

<llo_original>
// kernel: decoder_rollout.1
$region0: #{decoder_rollout.1}
  #allocation0 [shape = 'u32[]', space=smem, size = 0x4, offset = 0x4, fixed_abs, tag = 'smem constant byte address 0x4 - core index']
  #allocation1 [shape = 'u32[144,128]{1,0:T(1,128)}', space=vmem, size = 0x12000, scoped, tag = 'internal scratch']
  #allocation2 [shape = 'f32[2,32,32]{2,1,0:T(8,128)}', space=vmem, size = 0x8000, scoped, tag = 'scratch operand']
  %s0 = inlined_call_operand.vmem [shape: f32[8,32,2], index: 0, kind: input, shape index: {}]
  %s1 = inlined_call_operand.vmem [shape: f32[2,32,32], index: 1, kind: input, shape index: {}, may-alias: {1,7}]
  %s2 = inlined_call_operand.vmem [shape: f32[32,32], index: 2, kind: input, shape index: {}]
  %s3 = inlined_call_operand.vmem [shape: f32[103,96], index: 3, kind: input, shape index: {}]
  %s4 = inlined_call_operand.vmem [shape: f32[193,96], index: 4, kind: input, shape index: {}]
  %s5 = inlined_call_operand.vmem [shape: f32[33,2], index: 5, kind: input, shape index: {}]
  %s6 = inlined_call_operand.vmem [shape: f32[8,32,2], index: 6, kind: output, shape index: {0}]
  %s7 = inlined_call_operand.vmem [shape: f32[2,32,32], index: 7, kind: output, shape index: {1}, may-alias: {1,7}]
  %8 = xla_tuple %s6, %s7
  %s9 = sld [smem:[#allocation0]]
  $region73: #{decoder_rollout.1} parent=0
    _
  %s11 = ssub.s32 1, %s9
  %s12 = scalar_select 0, %s11, %s9
  loop: start=0, step=1, limit=10
  $region2: #{decoder_rollout.1} parent=0 // loop_pre_header
    _
  $region3: #{decoder_rollout.1} parent=0 // loop_header
    %s14 = sphi 0, %s18
    %p15 = scmp.ge.s32.totalorder %s14, 10
    %s24 = sphi 0, %s26
    %s27 = sphi 0, %s24
    %s28 = sphi 0, %s27
    %s44 = sphi 0, %s28
    %s48 = sphi 0, %s48
    %s50 = sphi 0, %s48
    %s51 = sphi 0, %s50
    %s65 = sphi 0, %s51
    %s69 = sphi 0, %s69
    %s71 = sphi 0, %s69
    %s72 = sphi 0, %s71
    %s86 = sphi 0, %s72
    %s90 = sphi 0, %s90
    %s92 = sphi 0, %s90
    %s93 = sphi 0, %s92
    %s107 = sphi 0, %s93
    %s111 = sphi 0, %s111
    %s113 = sphi 0, %s111
    %s114 = sphi 0, %s113
    %s128 = sphi 0, %s114
    %s132 = sphi 0, %s132
    %s134 = sphi 0, %s132
    %s135 = sphi 0, %s134
    %s149 = sphi 0, %s135
    %s155 = sphi 0, %s157
    %s158 = sphi 0, %s155
    %s159 = sphi 0, %s158
    %s175 = sphi 0, %s159
    %s179 = sphi 0, %s179
    %s181 = sphi 0, %s179
    %s182 = sphi 0, %s181
    %s196 = sphi 0, %s182
  $region4: #{decoder_rollout.1} parent=0 // loop_header_branch
    %17 = sbr.rel (%p15) target = $region8
  $region5: #{decoder_rollout.1} parent=0 // loop_body
    %s19 = ssub.s32 %s14, 1
    %s20 = ssub.s32 %s14, 2
    %s21 = sadd.s32 %s14, 1
    %s22 = ssub.s32 %s14, %s21
    %p23 = scmp.eq.s32.totalorder %s22, 0
    %s25 = sadd.s32 %s24, 1
    %s26 = scalar_select %p23, %s24, %s25
    %p29 = pneg %p23
    %p30 = scmp.eq.s32.totalorder %s14, 7
    %p31 = por %p29, %p30
    %p32 = scmp.ne.s32.totalorder %s24, %s27
    %p33 = scmp.eq.s32.totalorder %s14, 0
    %p34 = por %p32, %p33
    %p35 = scmp.ne.s32.totalorder %s24, %s27
    %p36 = scmp.eq.s32.totalorder %s19, 7
    %p37 = por %p35, %p36
    %p38 = scmp.ne.s32.totalorder %s27, %s28
    %p39 = scmp.eq.s32.totalorder %s19, 0
    %p40 = por %p38, %p39
    %p41 = scmp.ne.s32.totalorder %s27, %s28
    %p42 = scmp.eq.s32.totalorder %s20, 7
    %p43 = por %p41, %p42
    %p45 = scmp.ne.s32.totalorder %s28, %s44
    %p46 = scmp.eq.s32.totalorder %s20, 0
    %p47 = por %p45, %p46
    %s49 = sadd.s32 %s48, 1
    %p52 = scmp.eq.s32.totalorder %s14, 7
    %p53 = scmp.ne.s32.totalorder %s48, %s50
    %p54 = scmp.eq.s32.totalorder %s14, 0
    %p55 = por %p53, %p54
    %p56 = scmp.ne.s32.totalorder %s48, %s50
    %p57 = scmp.eq.s32.totalorder %s19, 7
    %p58 = por %p56, %p57
    %p59 = scmp.ne.s32.totalorder %s50, %s51
    %p60 = scmp.eq.s32.totalorder %s19, 0
    %p61 = por %p59, %p60
    %p62 = scmp.ne.s32.totalorder %s50, %s51
    %p63 = scmp.eq.s32.totalorder %s20, 7
    %p64 = por %p62, %p63
    %p66 = scmp.ne.s32.totalorder %s51, %s65
    %p67 = scmp.eq.s32.totalorder %s20, 0
    %p68 = por %p66, %p67
    %s70 = sadd.s32 %s69, 1
    %p73 = scmp.eq.s32.totalorder %s14, 7
    %p74 = scmp.ne.s32.totalorder %s69, %s71
    %p75 = scmp.eq.s32.totalorder %s14, 0
    %p76 = por %p74, %p75
    %p77 = scmp.ne.s32.totalorder %s69, %s71
    %p78 = scmp.eq.s32.totalorder %s19, 7
    %p79 = por %p77, %p78
    %p80 = scmp.ne.s32.totalorder %s71, %s72
    %p81 = scmp.eq.s32.totalorder %s19, 0
    %p82 = por %p80, %p81
    %p83 = scmp.ne.s32.totalorder %s71, %s72
    %p84 = scmp.eq.s32.totalorder %s20, 7
    %p85 = por %p83, %p84
    %p87 = scmp.ne.s32.totalorder %s72, %s86
    %p88 = scmp.eq.s32.totalorder %s20, 0
    %p89 = por %p87, %p88
    %s91 = sadd.s32 %s90, 1
    %p94 = scmp.eq.s32.totalorder %s14, 7
    %p95 = scmp.ne.s32.totalorder %s90, %s92
    %p96 = scmp.eq.s32.totalorder %s14, 0
    %p97 = por %p95, %p96
    %p98 = scmp.ne.s32.totalorder %s90, %s92
    %p99 = scmp.eq.s32.totalorder %s19, 7
    %p100 = por %p98, %p99
    %p101 = scmp.ne.s32.totalorder %s92, %s93
    %p102 = scmp.eq.s32.totalorder %s19, 0
    %p103 = por %p101, %p102
    %p104 = scmp.ne.s32.totalorder %s92, %s93
    %p105 = scmp.eq.s32.totalorder %s20, 7
    %p106 = por %p104, %p105
    %p108 = scmp.ne.s32.totalorder %s93, %s107
    %p109 = scmp.eq.s32.totalorder %s20, 0
    %p110 = por %p108, %p109
    %s112 = sadd.s32 %s111, 1
    %p115 = scmp.eq.s32.totalorder %s14, 7
    %p116 = scmp.ne.s32.totalorder %s111, %s113
    %p117 = scmp.eq.s32.totalorder %s14, 0
    %p118 = por %p116, %p117
    %p119 = scmp.ne.s32.totalorder %s111, %s113
    %p120 = scmp.eq.s32.totalorder %s19, 7
    %p121 = por %p119, %p120
    %p122 = scmp.ne.s32.totalorder %s113, %s114
    %p123 = scmp.eq.s32.totalorder %s19, 0
    %p124 = por %p122, %p123
    %p125 = scmp.ne.s32.totalorder %s113, %s114
    %p126 = scmp.eq.s32.totalorder %s20, 7
    %p127 = por %p125, %p126
    %p129 = scmp.ne.s32.totalorder %s114, %s128
    %p130 = scmp.eq.s32.totalorder %s20, 0
    %p131 = por %p129, %p130
    %s133 = sadd.s32 %s132, 1
    %p136 = scmp.eq.s32.totalorder %s14, 7
    %p137 = scmp.ne.s32.totalorder %s132, %s134
    %p138 = scmp.eq.s32.totalorder %s14, 0
    %p139 = por %p137, %p138
    %p140 = scmp.ne.s32.totalorder %s132, %s134
    %p141 = scmp.eq.s32.totalorder %s19, 7
    %p142 = por %p140, %p141
    %p143 = scmp.ne.s32.totalorder %s134, %s135
    %p144 = scmp.eq.s32.totalorder %s19, 0
    %p145 = por %p143, %p144
    %p146 = scmp.ne.s32.totalorder %s134, %s135
    %p147 = scmp.eq.s32.totalorder %s20, 7
    %p148 = por %p146, %p147
    %p150 = scmp.ne.s32.totalorder %s135, %s149
    %p151 = scmp.eq.s32.totalorder %s20, 0
    %p152 = por %p150, %p151
    %s153 = ssub.s32 %s14, %s21
    %p154 = scmp.eq.s32.totalorder %s153, 0
    %s156 = sadd.s32 %s155, 1
    %s157 = scalar_select %p154, %s155, %s156
    %p160 = pneg %p154
    %p161 = scmp.eq.s32.totalorder %s14, 7
    %p162 = por %p160, %p161
    %p163 = scmp.ne.s32.totalorder %s155, %s158
    %p164 = scmp.eq.s32.totalorder %s14, 0
    %p165 = por %p163, %p164
    %p166 = scmp.ne.s32.totalorder %s155, %s158
    %p167 = scmp.eq.s32.totalorder %s19, 7
    %p168 = por %p166, %p167
    %p169 = scmp.ne.s32.totalorder %s158, %s159
    %p170 = scmp.eq.s32.totalorder %s19, 0
    %p171 = por %p169, %p170
    %p172 = scmp.ne.s32.totalorder %s158, %s159
    %p173 = scmp.eq.s32.totalorder %s20, 7
    %p174 = por %p172, %p173
    %p176 = scmp.ne.s32.totalorder %s159, %s175
    %p177 = scmp.eq.s32.totalorder %s20, 0
    %p178 = por %p176, %p177
    %s180 = sadd.s32 %s179, 1
    %p183 = scmp.eq.s32.totalorder %s14, 7
    %p184 = scmp.ne.s32.totalorder %s179, %s181
    %p185 = scmp.eq.s32.totalorder %s14, 0
    %p186 = por %p184, %p185
    %p187 = scmp.ne.s32.totalorder %s179, %s181
    %p188 = scmp.eq.s32.totalorder %s19, 7
    %p189 = por %p187, %p188
    %p190 = scmp.ne.s32.totalorder %s181, %s182
    %p191 = scmp.eq.s32.totalorder %s19, 0
    %p192 = por %p190, %p191
    %p193 = scmp.ne.s32.totalorder %s181, %s182
    %p194 = scmp.eq.s32.totalorder %s20, 7
    %p195 = por %p193, %p194
    %p197 = scmp.ne.s32.totalorder %s182, %s196
    %p198 = scmp.eq.s32.totalorder %s20, 0
    %p199 = por %p197, %p198
    %p200 = scmp.le.s32.totalorder 1, %s14
    %p201 = scmp.lt.s32.totalorder %s14, 9
    %p202 = pnand %p200, %p201
    %p203 = pneg %p202
    // Predicated region
    $region9: #{decoder_rollout.1} parent=5 // pred_check
      _
    $region10: #{decoder_rollout.1} parent=5 // pred_check_branch
      %205 = sbr.rel (%p202) target = $region12
    $region11: #{decoder_rollout.1} parent=5 // pred_region
      %s206 = ssub.s32 %s14, 1
      // Predicated region
      $region13: #{decoder_rollout.1} parent=11 // pred_check
        %p207 = pneg %p61
      $region14: #{decoder_rollout.1} parent=11 // pred_check_branch
        %209 = sbr.rel (%p207) target = $region16
      $region15: #{decoder_rollout.1} parent=11 // pred_region
        _
      $region16: #{decoder_rollout.1} parent=11 // pred_fallthru
        _
      // Predicated region
      $region17: #{decoder_rollout.1} parent=11 // pred_check
        %p210 = pneg %p82
      $region18: #{decoder_rollout.1} parent=11 // pred_check_branch
        %212 = sbr.rel (%p210) target = $region20
      $region19: #{decoder_rollout.1} parent=11 // pred_region
        _
      $region20: #{decoder_rollout.1} parent=11 // pred_fallthru
        _
      // Predicated region
      $region21: #{decoder_rollout.1} parent=11 // pred_check
        %p213 = pneg %p103
      $region22: #{decoder_rollout.1} parent=11 // pred_check_branch
        %215 = sbr.rel (%p213) target = $region24
      $region23: #{decoder_rollout.1} parent=11 // pred_region
        _
      $region24: #{decoder_rollout.1} parent=11 // pred_fallthru
        _
      // Predicated region
      $region25: #{decoder_rollout.1} parent=11 // pred_check
        %p216 = pneg %p124
      $region26: #{decoder_rollout.1} parent=11 // pred_check_branch
        %218 = sbr.rel (%p216) target = $region28
      $region27: #{decoder_rollout.1} parent=11 // pred_region
        _
      $region28: #{decoder_rollout.1} parent=11 // pred_fallthru
        _
      // Predicated region
      $region29: #{decoder_rollout.1} parent=11 // pred_check
        %p219 = pneg %p145
      $region30: #{decoder_rollout.1} parent=11 // pred_check_branch
        %221 = sbr.rel (%p219) target = $region32
      $region31: #{decoder_rollout.1} parent=11 // pred_region
        _
      $region32: #{decoder_rollout.1} parent=11 // pred_fallthru
        _
    $region12: #{decoder_rollout.1} parent=5 // pred_fallthru
      _
    %p222 = scmp.lt.s32.totalorder %s14, 8
    // Predicated region
    $region33: #{decoder_rollout.1} parent=5 // pred_check
      %p223 = pneg %p222
    $region34: #{decoder_rollout.1} parent=5 // pred_check_branch
      %225 = sbr.rel (%p223) target = $region36
    $region35: #{decoder_rollout.1} parent=5 // pred_region
      // Predicated region
      $region37: #{decoder_rollout.1} parent=35 // pred_check
        %p226 = pneg %p34
      $region38: #{decoder_rollout.1} parent=35 // pred_check_branch
        %228 = sbr.rel (%p226) target = $region40
      $region39: #{decoder_rollout.1} parent=35 // pred_region
        %p229 = scmp.lt.s32.totalorder %s14, 7
        %s230 = scalar_select %p229, %s14, 7
        %s231 = smul.addr %s230, 4
        %s232 = smul.addr %s231, 8
        %s233 = scalar_lea.vmem %s0, %s232
      $region40: #{decoder_rollout.1} parent=35 // pred_fallthru
        _
    $region36: #{decoder_rollout.1} parent=5 // pred_fallthru
      _
    %p234 = scmp.le.s32.totalorder 1, %s14
    %p235 = scmp.lt.s32.totalorder %s14, 9
    %p236 = pnand %p234, %p235
    %p237 = pneg %p236
    // Predicated region
    $region41: #{decoder_rollout.1} parent=5 // pred_check
      _
    $region42: #{decoder_rollout.1} parent=5 // pred_check_branch
      %239 = sbr.rel (%p236) target = $region44
    $region43: #{decoder_rollout.1} parent=5 // pred_region
      %s240 = ssub.s32 %s14, 1
      %p241 = scmp.lt.s32.totalorder %s19, 7
      %s242 = scalar_select %p241, %s19, 7
      %s243 = smul.addr %s242, 4
      %s244 = smul.addr %s243, 8
      %s245 = scalar_lea.vmem %s0, %s244
      %p246 = pneg %p40
      %p247 = pneg %p37
      %p248 = pneg %p61
      %p249 = pneg %p58
      %p250 = pneg %p82
      %p251 = pneg %p79
      %p252 = pneg %p103
      %p253 = pneg %p100
      %p254 = pneg %p124
      %p255 = pneg %p121
      %p256 = pneg %p145
      %p257 = pneg %p142
      %p258 = pneg %p171
      %p259 = pneg %p168
      %p260 = scmp.lt.s32.totalorder %s19, 7
      %s261 = scalar_select %p260, %s19, 7
      %s262 = smul.addr %s261, 4
      %s263 = smul.addr %s262, 8
      %s264 = scalar_lea.vmem %s6, %s263
      %p265 = pneg %p192
      %p266 = pneg %p189
      %p267 = scmp.lt.s32.totalorder %s19, 7
      %s268 = scalar_select %p267, %s19, 7
      %s269 = smul.addr %s268, 4
      %s270 = smul.addr %s269, 8
      %s271 = scalar_lea.vmem %s0, %s270
      %p272 = scmp.lt.s32.totalorder %s19, 7
      %s273 = scalar_select %p272, %s19, 7
      %s274 = smul.addr %s273, 4
      %s275 = smul.addr %s274, 8
      %s276 = scalar_lea.vmem %s6, %s275
      %p277 = scmp.eq.s32.totalorder %s19, 0
      // Predicated region
      $region45: #{decoder_rollout.1} parent=43 // pred_check
        %p278 = pneg %p277
      $region46: #{decoder_rollout.1} parent=43 // pred_check_branch
        %280 = sbr.rel (%p278) target = $region48
      $region47: #{decoder_rollout.1} parent=43 // pred_region
        %v281 = vld [vmem:[%s1] sm:$0xff]
        %v282 = vld [vmem:[%s1 + $0x8] sm:$0xff]
        %v283 = vld [vmem:[%s1 + $0x10] sm:$0xff]
        %v284 = vld [vmem:[%s1 + $0x18] sm:$0xff]
        %v285 = vld [vmem:[%s1 + $0x20] sm:$0xff]
        %v286 = vld [vmem:[%s1 + $0x28] sm:$0xff]
        %v287 = vld [vmem:[%s1 + $0x30] sm:$0xff]
        %v288 = vld [vmem:[%s1 + $0x38] sm:$0xff]
        %vm289 = vcmask 261120
        %290 = vst.msk [vmem:[#allocation2] sm:$0xff] %vm289, %v281
        %291 = vst.msk [vmem:[#allocation2 + $0x8] sm:$0xff] %vm289, %v282
        %292 = vst.msk [vmem:[#allocation2 + $0x10] sm:$0xff] %vm289, %v283
        %293 = vst.msk [vmem:[#allocation2 + $0x18] sm:$0xff] %vm289, %v284
        %294 = vst.msk [vmem:[#allocation2 + $0x20] sm:$0xff] %vm289, %v285
        %295 = vst.msk [vmem:[#allocation2 + $0x28] sm:$0xff] %vm289, %v286
        %296 = vst.msk [vmem:[#allocation2 + $0x30] sm:$0xff] %vm289, %v287
        %297 = vst.msk [vmem:[#allocation2 + $0x38] sm:$0xff] %vm289, %v288
      $region48: #{decoder_rollout.1} parent=43 // pred_fallthru
        _
      %v298 = vld [vmem:[%s2] sm:$0xff]
      %v299 = vld [vmem:[%s2 + $0x8] sm:$0xff]
      %v300 = vld [vmem:[%s2 + $0x10] sm:$0xff]
      %v301 = vld [vmem:[%s2 + $0x18] sm:$0xff]
      %v302 = vld [vmem:[%s271] sm:$0xff]
      %v303 = vld [vmem:[%s271 + $0x8] sm:$0xff]
      %v304 = vld [vmem:[%s271 + $0x10] sm:$0xff]
      %v305 = vld [vmem:[%s271 + $0x18] sm:$0xff]
      %v306 = vld [vmem:[#allocation2] sm:$0xff]
      %v307 = vld [vmem:[#allocation2 + $0x8] sm:$0xff]
      %v308 = vld [vmem:[#allocation2 + $0x10] sm:$0xff]
      %v309 = vld [vmem:[#allocation2 + $0x18] sm:$0xff]
      %314 = vrot.lane.b32.xlu0 %v306, 2
      %v315 = vpop.permute.xlu0 %314
      %316 = vrot.lane.b32.xlu0 %v307, 2
      %v317 = vpop.permute.xlu0 %316
      %318 = vrot.lane.b32.xlu0 %v308, 2
      %v319 = vpop.permute.xlu0 %318
      %320 = vrot.lane.b32.xlu0 %v309, 2
      %v321 = vpop.permute.xlu0 %320
      %vm326 = vcmask 15360
      %v327 = vsel %vm326, %v302, %v315
      %v328 = vsel %vm326, %v303, %v317
      %v329 = vsel %vm326, %v304, %v319
      %v330 = vsel %vm326, %v305, %v321
      %vm331 = vcmask 261120
      %v333 = vsel %vm331, %v298, 0
      %v336 = vsel %vm331, %v299, 0
      %v339 = vsel %vm331, %v300, 0
      %v342 = vsel %vm331, %v301, 0
      %344 = vmatprep.subr.mxu0 0.0
      %345 = vmatpush1.msra.mxu0 %v327
      %346 = vmatprep.subr.mxu0 0.0
      %347 = vmatpush1.msra.mxu0 %v328
      %348 = vmatprep.subr.mxu0 0.0
      %349 = vmatpush1.msra.mxu0 %v329
      %350 = vmatprep.subr.mxu0 0.0
      %351 = vmatpush1.msra.mxu0 %v330
      %352 = vmatprep.subr.mxu0 0.0
      %353 = vmatpush1.msra.mxu0 0.0
      %354 = vmatprep.subr.mxu0 0.0
      %355 = vmatpush1.msra.mxu0 0.0
      %356 = vmatprep.subr.mxu0 0.0
      %357 = vmatpush1.msra.mxu0 0.0
      %358 = vmatprep.subr.mxu0 0.0
      %359 = vmatpush1.msra.mxu0 0.0
      %360 = vmatprep.subr.mxu0 0.0
      %361 = vmatpush1.msra.mxu0 0.0
      %362 = vmatprep.subr.mxu0 0.0
      %363 = vmatpush1.msra.mxu0 0.0
      %364 = vmatprep.subr.mxu0 0.0
      %365 = vmatpush1.msra.mxu0 0.0
      %366 = vmatprep.subr.mxu0 0.0
      %367 = vmatpush1.msra.mxu0 0.0
      %368 = vmatprep.subr.mxu0 0.0
      %369 = vmatpush1.msra.mxu0 0.0
      %370 = vmatprep.subr.mxu0 0.0
      %371 = vmatpush1.msra.mxu0 0.0
      %372 = vmatprep.subr.mxu0 0.0
      %373 = vmatpush1.msra.mxu0 0.0
      %374 = vmatprep.subr.mxu0 0.0
      %375 = vmatpush1.msra.mxu0 0.0
      %376 = vmatprep.subr.mxu0 0.0
      %377 = vmatpush1.msra.mxu0 0.0
      %378 = vmatprep.subr.mxu0 0.0
      %379 = vmatpush1.msra.mxu0 0.0
      %380 = vmatprep.subr.mxu0 0.0
      %381 = vmatpush1.msra.mxu0 0.0
      %382 = vmatprep.subr.mxu0 0.0
      %383 = vmatpush1.msra.mxu0 0.0
      %384 = vmatprep.subr.mxu0 0.0
      %385 = vmatpush1.msra.mxu0 0.0
      %386 = vmatprep.subr.mxu0 0.0
      %387 = vmatpush1.msra.mxu0 0.0
      %388 = vmatprep.subr.mxu0 0.0
      %389 = vmatpush1.msra.mxu0 0.0
      %390 = vmatprep.subr.mxu0 0.0
      %391 = vmatpush1.msra.mxu0 0.0
      %392 = vmatprep.subr.mxu0 0.0
      %393 = vmatpush1.msra.mxu0 0.0
      %394 = vmatprep.subr.mxu0 0.0
      %395 = vmatpush1.msra.mxu0 0.0
      %396 = vmatprep.subr.mxu0 0.0
      %397 = vmatpush1.msra.mxu0 0.0
      %398 = vmatprep.subr.mxu0 0.0
      %399 = vmatpush1.msra.mxu0 0.0
      %400 = vmatprep.subr.mxu0 0.0
      %401 = vmatpush1.msra.mxu0 0.0
      %402 = vmatprep.subr.mxu0 0.0
      %403 = vmatpush1.msra.mxu0 0.0
      %404 = vmatprep.subr.mxu0 0.0
      %405 = vmatpush1.msra.mxu0 0.0
      %406 = vmatprep.subr.mxu0 0.0
      %407 = vmatpush1.msra.mxu0 0.0
      %408 = vmatprep.mubr.f32.mxu0 0.0
      %409 = vmatmul.mubr.f32.gmra.mrb[0].mxu0 %v333
      %v410 = vpop.f32.mrb[0].mxu0
      %v411 = vadd.f32 0.0, %v410
      %v412 = vpop.f32.mrb[0].mxu0
      %413 = vmatprep.mubr.f32.mxu0 0.0
      %414 = vmatmul.mubr.f32.gmra.mrb[0].mxu0 %v336
      %v415 = vpop.f32.mrb[0].mxu0
      %v416 = vadd.f32 0.0, %v415
      %v417 = vpop.f32.mrb[0].mxu0
      %418 = vmatprep.mubr.f32.mxu0 0.0
      %419 = vmatmul.mubr.f32.gmra.mrb[0].mxu0 %v339
      %v420 = vpop.f32.mrb[0].mxu0
      %v421 = vadd.f32 0.0, %v420
      %v422 = vpop.f32.mrb[0].mxu0
      %423 = vmatprep.mubr.f32.mxu0 0.0
      %424 = vmatmul.mubr.f32.gmra.mrb[0].mxu0 %v342
      %v425 = vpop.f32.mrb[0].mxu0
      %v426 = vadd.f32 0.0, %v425
      %v427 = vpop.f32.mrb[0].mxu0
      %428 = vdwg.mxu0
      %429 = vmatprep.subr.mxu0 0.0
      %430 = vmatpush1.msra.mxu0 %v411
      %431 = vmatprep.subr.mxu0 0.0
      %432 = vmatpush1.msra.mxu0 %v416
      %433 = vmatprep.subr.mxu0 0.0
      %434 = vmatpush1.msra.mxu0 %v421
      %435 = vmatprep.subr.mxu0 0.0
      %436 = vmatpush1.msra.mxu0 %v426
      %437 = vmatprep.subr.mxu0 0.0
      %438 = vmatpush1.msra.mxu0 0.0
      %439 = vmatprep.subr.mxu0 0.0
      %440 = vmatpush1.msra.mxu0 0.0
      %441 = vmatprep.subr.mxu0 0.0
      %442 = vmatpush1.msra.mxu0 0.0
      %443 = vmatprep.subr.mxu0 0.0
      %444 = vmatpush1.msra.mxu0 0.0
      %445 = vmatprep.subr.mxu0 0.0
      %446 = vmatpush1.msra.mxu0 0.0
      %447 = vmatprep.subr.mxu0 0.0
      %448 = vmatpush1.msra.mxu0 0.0
      %449 = vmatprep.subr.mxu0 0.0
      %450 = vmatpush1.msra.mxu0 0.0
      %451 = vmatprep.subr.mxu0 0.0
      %452 = vmatpush1.msra.mxu0 0.0
      %453 = vmatprep.subr.mxu0 0.0
      %454 = vmatpush1.msra.mxu0 0.0
      %455 = vmatprep.subr.mxu0 0.0
      %456 = vmatpush1.msra.mxu0 0.0
      %457 = vmatprep.subr.mxu0 0.0
      %458 = vmatpush1.msra.mxu0 0.0
      %459 = vmatprep.subr.mxu0 0.0
      %460 = vmatpush1.msra.mxu0 0.0
      %461 = vmatprep.subr.mxu0 0.0
      %462 = vmatpush1.msra.mxu0 0.0
      %463 = vmatprep.subr.mxu0 0.0
      %464 = vmatpush1.msra.mxu0 0.0
      %465 = vmatprep.subr.mxu0 0.0
      %466 = vmatpush1.msra.mxu0 0.0
      %467 = vmatprep.subr.mxu0 0.0
      %468 = vmatpush1.msra.mxu0 0.0
      %469 = vmatprep.subr.mxu0 0.0
      %470 = vmatpush1.msra.mxu0 0.0
      %471 = vmatprep.subr.mxu0 0.0
      %472 = vmatpush1.msra.mxu0 0.0
      %473 = vmatprep.subr.mxu0 0.0
      %474 = vmatpush1.msra.mxu0 0.0
      %475 = vmatprep.subr.mxu0 0.0
      %476 = vmatpush1.msra.mxu0 0.0
      %477 = vmatprep.subr.mxu0 0.0
      %478 = vmatpush1.msra.mxu0 0.0
      %479 = vmatprep.subr.mxu0 0.0
      %480 = vmatpush1.msra.mxu0 0.0
      %481 = vmatprep.subr.mxu0 0.0
      %482 = vmatpush1.msra.mxu0 0.0
      %483 = vmatprep.subr.mxu0 0.0
      %484 = vmatpush1.msra.mxu0 0.0
      %485 = vmatprep.subr.mxu0 0.0
      %486 = vmatpush1.msra.mxu0 0.0
      %487 = vmatprep.subr.mxu0 0.0
      %488 = vmatpush1.msra.mxu0 0.0
      %489 = vmatprep.subr.mxu0 0.0
      %490 = vmatpush1.msra.mxu0 0.0
      %491 = vmatprep.subr.mxu0 0.0
      %492 = vmatpush1.msra.mxu0 0.0
      %493 = vmatprep.mubr.f32.mxu0 0.0
      %494 = vmatmul.mubr.f32.gmra.mrb[0].mxu0 %v333
      %v495 = vpop.f32.mrb[0].mxu0
      %v496 = vadd.f32 0.0, %v495
      %v497 = vpop.f32.mrb[0].mxu0
      %498 = vmatprep.mubr.f32.mxu0 0.0
      %499 = vmatmul.mubr.f32.gmra.mrb[0].mxu0 %v336
      %v500 = vpop.f32.mrb[0].mxu0
      %v501 = vadd.f32 0.0, %v500
      %v502 = vpop.f32.mrb[0].mxu0
      %503 = vmatprep.mubr.f32.mxu0 0.0
      %504 = vmatmul.mubr.f32.gmra.mrb[0].mxu0 %v339
      %v505 = vpop.f32.mrb[0].mxu0
      %v506 = vadd.f32 0.0, %v505
      %v507 = vpop.f32.mrb[0].mxu0
      %508 = vmatprep.mubr.f32.mxu0 0.0
      %509 = vmatmul.mubr.f32.gmra.mrb[0].mxu0 %v342
      %v510 = vpop.f32.mrb[0].mxu0
      %v511 = vadd.f32 0.0, %v510
      %v512 = vpop.f32.mrb[0].mxu0
      %513 = vdwg.mxu0
      %518 = vrot.lane.b32.xlu0 %v411, 34
      %v519 = vpop.permute.xlu0 %518
      %520 = vrot.lane.b32.xlu0 %v416, 34
      %v521 = vpop.permute.xlu0 %520
      %522 = vrot.lane.b32.xlu0 %v421, 34
      %v523 = vpop.permute.xlu0 %522
      %524 = vrot.lane.b32.xlu0 %v426, 34
      %v525 = vpop.permute.xlu0 %524
      %534 = vrot.lane.b32.xlu0 %v496, 68
      %v535 = vpop.permute.xlu0 %534
      %536 = vrot.lane.b32.xlu0 %v501, 68
      %v537 = vpop.permute.xlu0 %536
      %538 = vrot.lane.b32.xlu0 %v506, 68
      %v539 = vpop.permute.xlu0 %538
      %540 = vrot.lane.b32.xlu0 %v511, 68
      %v541 = vpop.permute.xlu0 %540
      %vm546 = vcmask 277504
      %v547 = vsel %vm546, %v327, %v519
      %v548 = vsel %vm546, %v328, %v521
      %v549 = vsel %vm546, %v329, %v523
      %v550 = vsel %vm546, %v330, %v525
      %vm551 = vcmask 556032
      %v552 = vsel %vm551, %v547, %v535
      %v553 = vsel %vm551, %v548, %v537
      %v554 = vsel %vm551, %v549, %v539
      %v555 = vsel %vm551, %v550, %v541
      %v556 = vld [vmem:[%s3] sm:$0xff]
      %v557 = vld [vmem:[%s3 + $0x8] sm:$0xff]
      %v558 = vld [vmem:[%s3 + $0x10] sm:$0xff]
      %v559 = vld [vmem:[%s3 + $0x18] sm:$0xff]
      %v560 = vld [vmem:[%s3 + $0x20] sm:$0xff]
      %v561 = vld [vmem:[%s3 + $0x28] sm:$0xff]
      %v562 = vld [vmem:[%s3 + $0x30] sm:$0xff]
      %v563 = vld [vmem:[%s3 + $0x38] sm:$0xff]
      %v564 = vld [vmem:[%s3 + $0x40] sm:$0xff]
      %v565 = vld [vmem:[%s3 + $0x48] sm:$0xff]
      %v566 = vld [vmem:[%s3 + $0x50] sm:$0xff]
      %v567 = vld [vmem:[%s3 + $0x58] sm:$0xff]
      %v568 = vld [vmem:[%s3 + $0x60] sm:$0x3f]
      %v569 = vld [vmem:[%s3 + $0x66] sm:$0x1]
      %v570 = vlaneseq
      %v571 = vshrl.u32 %v570, 7
      %v572 = vsub.s32 0, %v571
      %v573 = vrot.slane %v569, %v572
      %vm574 = vcmask 834560
      %v576 = vsel %vm574, %v552, 0
      %v579 = vsel %vm574, %v553, 0
      %v582 = vsel %vm574, %v554, 0
      %v585 = vsel %vm574, %v555, 0
      %vm587 = vcmask 1045504
      %v589 = vsel %vm587, %v568, 0
      %591 = vmatprep.subr.mxu0 0.0
      %592 = vmatpush1.msra.mxu0 %v556
      %593 = vmatprep.subr.mxu0 0.0
      %594 = vmatpush1.msra.mxu0 %v557
      %595 = vmatprep.subr.mxu0 0.0
      %596 = vmatpush1.msra.mxu0 %v558
      %597 = vmatprep.subr.mxu0 0.0
      %598 = vmatpush1.msra.mxu0 %v559
      %599 = vmatprep.subr.mxu0 0.0
      %600 = vmatpush1.msra.mxu0 %v560
      %601 = vmatprep.subr.mxu0 0.0
      %602 = vmatpush1.msra.mxu0 %v561
      %603 = vmatprep.subr.mxu0 0.0
      %604 = vmatpush1.msra.mxu0 %v562
      %605 = vmatprep.subr.mxu0 0.0
      %606 = vmatpush1.msra.mxu0 %v563
      %607 = vmatprep.subr.mxu0 0.0
      %608 = vmatpush1.msra.mxu0 %v564
      %609 = vmatprep.subr.mxu0 0.0
      %610 = vmatpush1.msra.mxu0 %v565
      %611 = vmatprep.subr.mxu0 0.0
      %612 = vmatpush1.msra.mxu0 %v566
      %613 = vmatprep.subr.mxu0 0.0
      %614 = vmatpush1.msra.mxu0 %v567
      %615 = vmatprep.subr.mxu0 0.0
      %616 = vmatpush1.msra.mxu0 %v589
      %617 = vmatprep.subr.mxu0 0.0
      %618 = vmatpush1.msra.mxu0 0.0
      %619 = vmatprep.subr.mxu0 0.0
      %620 = vmatpush1.msra.mxu0 0.0
      %621 = vmatprep.subr.mxu0 0.0
      %622 = vmatpush1.msra.mxu0 0.0
      %623 = vmatprep.subr.mxu0 0.0
      %624 = vmatpush1.msra.mxu0 0.0
      %625 = vmatprep.subr.mxu0 0.0
      %626 = vmatpush1.msra.mxu0 0.0
      %627 = vmatprep.subr.mxu0 0.0
      %628 = vmatpush1.msra.mxu0 0.0
      %629 = vmatprep.subr.mxu0 0.0
      %630 = vmatpush1.msra.mxu0 0.0
      %631 = vmatprep.subr.mxu0 0.0
      %632 = vmatpush1.msra.mxu0 0.0
      %633 = vmatprep.subr.mxu0 0.0
      %634 = vmatpush1.msra.mxu0 0.0
      %635 = vmatprep.subr.mxu0 0.0
      %636 = vmatpush1.msra.mxu0 0.0
      %637 = vmatprep.subr.mxu0 0.0
      %638 = vmatpush1.msra.mxu0 0.0
      %639 = vmatprep.subr.mxu0 0.0
      %640 = vmatpush1.msra.mxu0 0.0
      %641 = vmatprep.subr.mxu0 0.0
      %642 = vmatpush1.msra.mxu0 0.0
      %643 = vmatprep.subr.mxu0 0.0
      %644 = vmatpush1.msra.mxu0 0.0
      %645 = vmatprep.subr.mxu0 0.0
      %646 = vmatpush1.msra.mxu0 0.0
      %647 = vmatprep.subr.mxu0 0.0
      %648 = vmatpush1.msra.mxu0 0.0
      %649 = vmatprep.subr.mxu0 0.0
      %650 = vmatpush1.msra.mxu0 0.0
      %651 = vmatprep.subr.mxu0 0.0
      %652 = vmatpush1.msra.mxu0 0.0
      %653 = vmatprep.subr.mxu0 0.0
      %654 = vmatpush1.msra.mxu0 0.0
      %655 = vmatprep.mubr.f32.mxu0 0.0
      %656 = vmatmul.mubr.f32.gmra.mrb[0].mxu0 %v576
      %v657 = vpop.f32.mrb[0].mxu0
      %v658 = vadd.f32 %v573, %v657
      %v659 = vpop.f32.mrb[0].mxu0
      %660 = vmatprep.mubr.f32.mxu0 0.0
      %661 = vmatmul.mubr.f32.gmra.mrb[0].mxu0 %v579
      %v662 = vpop.f32.mrb[0].mxu0
      %v663 = vadd.f32 %v573, %v662
      %v664 = vpop.f32.mrb[0].mxu0
      %665 = vmatprep.mubr.f32.mxu0 0.0
      %666 = vmatmul.mubr.f32.gmra.mrb[0].mxu0 %v582
      %v667 = vpop.f32.mrb[0].mxu0
      %v668 = vadd.f32 %v573, %v667
      %v669 = vpop.f32.mrb[0].mxu0
      %670 = vmatprep.mubr.f32.mxu0 0.0
      %671 = vmatmul.mubr.f32.gmra.mrb[0].mxu0 %v585
      %v672 = vpop.f32.mrb[0].mxu0
      %v673 = vadd.f32 %v573, %v672
      %v674 = vpop.f32.mrb[0].mxu0
      %675 = vdwg.mxu0
      %v676 = vxor.u32 %v658, 2147483648
      %v677 = vxor.u32 %v663, 2147483648
      %v678 = vxor.u32 %v668, 2147483648
      %v679 = vxor.u32 %v673, 2147483648
      %v680 = vmul.f32 %v676, 1.442695
      %v681 = vpow.pop %v680
      %v682 = vmul.f32 %v677, 1.442695
      %v683 = vpow.pop %v682
      %v684 = vmul.f32 %v678, 1.442695
      %v685 = vpow.pop %v684
      %v686 = vmul.f32 %v679, 1.442695
      %v687 = vpow.pop %v686
      %v688 = vadd.f32 %v681, 1.0
      %v689 = vadd.f32 %v683, 1.0
      %v690 = vadd.f32 %v685, 1.0
      %v691 = vadd.f32 %v687, 1.0
      %v692 = vrcp.pop %v688
      %v693 = vmul.f32 1.0, %v692
      %v694 = vrcp.pop %v689
      %v695 = vmul.f32 1.0, %v694
      %v696 = vrcp.pop %v690
      %v697 = vmul.f32 1.0, %v696
      %v698 = vrcp.pop %v691
      %v699 = vmul.f32 1.0, %v698
      %v700 = vmul.f32 %v693, %v306
      %v701 = vmul.f32 %v695, %v307
      %v702 = vmul.f32 %v697, %v308
      %v703 = vmul.f32 %v699, %v309
      %704 = vmatprep.subr.mxu0 0.0
      %705 = vmatpush1.msra.mxu0 %v700
      %706 = vmatprep.subr.mxu0 0.0
      %707 = vmatpush1.msra.mxu0 %v701
      %708 = vmatprep.subr.mxu0 0.0
      %709 = vmatpush1.msra.mxu0 %v702
      %710 = vmatprep.subr.mxu0 0.0
      %711 = vmatpush1.msra.mxu0 %v703
      %712 = vmatprep.subr.mxu0 0.0
      %713 = vmatpush1.msra.mxu0 0.0
      %714 = vmatprep.subr.mxu0 0.0
      %715 = vmatpush1.msra.mxu0 0.0
      %716 = vmatprep.subr.mxu0 0.0
      %717 = vmatpush1.msra.mxu0 0.0
      %718 = vmatprep.subr.mxu0 0.0
      %719 = vmatpush1.msra.mxu0 0.0
      %720 = vmatprep.subr.mxu0 0.0
      %721 = vmatpush1.msra.mxu0 0.0
      %722 = vmatprep.subr.mxu0 0.0
      %723 = vmatpush1.msra.mxu0 0.0
      %724 = vmatprep.subr.mxu0 0.0
      %725 = vmatpush1.msra.mxu0 0.0
      %726 = vmatprep.subr.mxu0 0.0
      %727 = vmatpush1.msra.mxu0 0.0
      %728 = vmatprep.subr.mxu0 0.0
      %729 = vmatpush1.msra.mxu0 0.0
      %730 = vmatprep.subr.mxu0 0.0
      %731 = vmatpush1.msra.mxu0 0.0
      %732 = vmatprep.subr.mxu0 0.0
      %733 = vmatpush1.msra.mxu0 0.0
      %734 = vmatprep.subr.mxu0 0.0
      %735 = vmatpush1.msra.mxu0 0.0
      %736 = vmatprep.subr.mxu0 0.0
      %737 = vmatpush1.msra.mxu0 0.0
      %738 = vmatprep.subr.mxu0 0.0
      %739 = vmatpush1.msra.mxu0 0.0
      %740 = vmatprep.subr.mxu0 0.0
      %741 = vmatpush1.msra.mxu0 0.0
      %742 = vmatprep.subr.mxu0 0.0
      %743 = vmatpush1.msra.mxu0 0.0
      %744 = vmatprep.subr.mxu0 0.0
      %745 = vmatpush1.msra.mxu0 0.0
      %746 = vmatprep.subr.mxu0 0.0
      %747 = vmatpush1.msra.mxu0 0.0
      %748 = vmatprep.subr.mxu0 0.0
      %749 = vmatpush1.msra.mxu0 0.0
      %750 = vmatprep.subr.mxu0 0.0
      %751 = vmatpush1.msra.mxu0 0.0
      %752 = vmatprep.subr.mxu0 0.0
      %753 = vmatpush1.msra.mxu0 0.0
      %754 = vmatprep.subr.mxu0 0.0
      %755 = vmatpush1.msra.mxu0 0.0
      %756 = vmatprep.subr.mxu0 0.0
      %757 = vmatpush1.msra.mxu0 0.0
      %758 = vmatprep.subr.mxu0 0.0
      %759 = vmatpush1.msra.mxu0 0.0
      %760 = vmatprep.subr.mxu0 0.0
      %761 = vmatpush1.msra.mxu0 0.0
      %762 = vmatprep.subr.mxu0 0.0
      %763 = vmatpush1.msra.mxu0 0.0
      %764 = vmatprep.subr.mxu0 0.0
      %765 = vmatpush1.msra.mxu0 0.0
      %766 = vmatprep.subr.mxu0 0.0
      %767 = vmatpush1.msra.mxu0 0.0
      %768 = vmatprep.mubr.f32.mxu0 0.0
      %769 = vmatmul.mubr.f32.gmra.mrb[0].mxu0 %v333
      %v770 = vpop.f32.mrb[0].mxu0
      %v771 = vadd.f32 0.0, %v770
      %v772 = vpop.f32.mrb[0].mxu0
      %773 = vmatprep.mubr.f32.mxu0 0.0
      %774 = vmatmul.mubr.f32.gmra.mrb[0].mxu0 %v336
      %v775 = vpop.f32.mrb[0].mxu0
      %v776 = vadd.f32 0.0, %v775
      %v777 = vpop.f32.mrb[0].mxu0
      %778 = vmatprep.mubr.f32.mxu0 0.0
      %779 = vmatmul.mubr.f32.gmra.mrb[0].mxu0 %v339
      %v780 = vpop.f32.mrb[0].mxu0
      %v781 = vadd.f32 0.0, %v780
      %v782 = vpop.f32.mrb[0].mxu0
      %783 = vmatprep.mubr.f32.mxu0 0.0
      %784 = vmatmul.mubr.f32.gmra.mrb[0].mxu0 %v342
      %v785 = vpop.f32.mrb[0].mxu0
      %v786 = vadd.f32 0.0, %v785
      %v787 = vpop.f32.mrb[0].mxu0
      %788 = vdwg.mxu0
      %789 = vmatprep.subr.mxu0 0.0
      %790 = vmatpush1.msra.mxu0 %v771
      %791 = vmatprep.subr.mxu0 0.0
      %792 = vmatpush1.msra.mxu0 %v776
      %793 = vmatprep.subr.mxu0 0.0
      %794 = vmatpush1.msra.mxu0 %v781
      %795 = vmatprep.subr.mxu0 0.0
      %796 = vmatpush1.msra.mxu0 %v786
      %797 = vmatprep.subr.mxu0 0.0
      %798 = vmatpush1.msra.mxu0 0.0
      %799 = vmatprep.subr.mxu0 0.0
      %800 = vmatpush1.msra.mxu0 0.0
      %801 = vmatprep.subr.mxu0 0.0
      %802 = vmatpush1.msra.mxu0 0.0
      %803 = vmatprep.subr.mxu0 0.0
      %804 = vmatpush1.msra.mxu0 0.0
      %805 = vmatprep.subr.mxu0 0.0
      %806 = vmatpush1.msra.mxu0 0.0
      %807 = vmatprep.subr.mxu0 0.0
      %808 = vmatpush1.msra.mxu0 0.0
      %809 = vmatprep.subr.mxu0 0.0
      %810 = vmatpush1.msra.mxu0 0.0
      %811 = vmatprep.subr.mxu0 0.0
      %812 = vmatpush1.msra.mxu0 0.0
      %813 = vmatprep.subr.mxu0 0.0
      %814 = vmatpush1.msra.mxu0 0.0
      %815 = vmatprep.subr.mxu0 0.0
      %816 = vmatpush1.msra.mxu0 0.0
      %817 = vmatprep.subr.mxu0 0.0
      %818 = vmatpush1.msra.mxu0 0.0
      %819 = vmatprep.subr.mxu0 0.0
      %820 = vmatpush1.msra.mxu0 0.0
      %821 = vmatprep.subr.mxu0 0.0
      %822 = vmatpush1.msra.mxu0 0.0
      %823 = vmatprep.subr.mxu0 0.0
      %824 = vmatpush1.msra.mxu0 0.0
      %825 = vmatprep.subr.mxu0 0.0
      %826 = vmatpush1.msra.mxu0 0.0
      %827 = vmatprep.subr.mxu0 0.0
      %828 = vmatpush1.msra.mxu0 0.0
      %829 = vmatprep.subr.mxu0 0.0
      %830 = vmatpush1.msra.mxu0 0.0
      %831 = vmatprep.subr.mxu0 0.0
      %832 = vmatpush1.msra.mxu0 0.0
      %833 = vmatprep.subr.mxu0 0.0
      %834 = vmatpush1.msra.mxu0 0.0
      %835 = vmatprep.subr.mxu0 0.0
      %836 = vmatpush1.msra.mxu0 0.0
      %837 = vmatprep.subr.mxu0 0.0
      %838 = vmatpush1.msra.mxu0 0.0
      %839 = vmatprep.subr.mxu0 0.0
      %840 = vmatpush1.msra.mxu0 0.0
      %841 = vmatprep.subr.mxu0 0.0
      %842 = vmatpush1.msra.mxu0 0.0
      %843 = vmatprep.subr.mxu0 0.0
      %844 = vmatpush1.msra.mxu0 0.0
      %845 = vmatprep.subr.mxu0 0.0
      %846 = vmatpush1.msra.mxu0 0.0
      %847 = vmatprep.subr.mxu0 0.0
      %848 = vmatpush1.msra.mxu0 0.0
      %849 = vmatprep.subr.mxu0 0.0
      %850 = vmatpush1.msra.mxu0 0.0
      %851 = vmatprep.subr.mxu0 0.0
      %852 = vmatpush1.msra.mxu0 0.0
      %853 = vmatprep.mubr.f32.mxu0 0.0
      %854 = vmatmul.mubr.f32.gmra.mrb[0].mxu0 %v333
      %v855 = vpop.f32.mrb[0].mxu0
      %v856 = vadd.f32 0.0, %v855
      %v857 = vpop.f32.mrb[0].mxu0
      %858 = vmatprep.mubr.f32.mxu0 0.0
      %859 = vmatmul.mubr.f32.gmra.mrb[0].mxu0 %v336
      %v860 = vpop.f32.mrb[0].mxu0
      %v861 = vadd.f32 0.0, %v860
      %v862 = vpop.f32.mrb[0].mxu0
      %863 = vmatprep.mubr.f32.mxu0 0.0
      %864 = vmatmul.mubr.f32.gmra.mrb[0].mxu0 %v339
      %v865 = vpop.f32.mrb[0].mxu0
      %v866 = vadd.f32 0.0, %v865
      %v867 = vpop.f32.mrb[0].mxu0
      %868 = vmatprep.mubr.f32.mxu0 0.0
      %869 = vmatmul.mubr.f32.gmra.mrb[0].mxu0 %v342
      %v870 = vpop.f32.mrb[0].mxu0
      %v871 = vadd.f32 0.0, %v870
      %v872 = vpop.f32.mrb[0].mxu0
      %873 = vdwg.mxu0
      %878 = vrot.lane.b32.xlu0 %v700, 2
      %v879 = vpop.permute.xlu0 %878
      %880 = vrot.lane.b32.xlu0 %v701, 2
      %v881 = vpop.permute.xlu0 %880
      %882 = vrot.lane.b32.xlu0 %v702, 2
      %v883 = vpop.permute.xlu0 %882
      %884 = vrot.lane.b32.xlu0 %v703, 2
      %v885 = vpop.permute.xlu0 %884
      %v890 = vsel %vm326, %v327, %v879
      %v891 = vsel %vm326, %v328, %v881
      %v892 = vsel %vm326, %v329, %v883
      %v893 = vsel %vm326, %v330, %v885
      %898 = vrot.lane.b32.xlu0 %v771, 2
      %v899 = vpop.permute.xlu0 %898
      %900 = vrot.lane.b32.xlu0 %v776, 2
      %v901 = vpop.permute.xlu0 %900
      %902 = vrot.lane.b32.xlu0 %v781, 2
      %v903 = vpop.permute.xlu0 %902
      %904 = vrot.lane.b32.xlu0 %v786, 2
      %v905 = vpop.permute.xlu0 %904
      %v910 = vsel %vm326, %v411, %v899
      %v911 = vsel %vm326, %v416, %v901
      %v912 = vsel %vm326, %v421, %v903
      %v913 = vsel %vm326, %v426, %v905
      %918 = vrot.lane.b32.xlu0 %v856, 2
      %v919 = vpop.permute.xlu0 %918
      %920 = vrot.lane.b32.xlu0 %v861, 2
      %v921 = vpop.permute.xlu0 %920
      %922 = vrot.lane.b32.xlu0 %v866, 2
      %v923 = vpop.permute.xlu0 %922
      %924 = vrot.lane.b32.xlu0 %v871, 2
      %v925 = vpop.permute.xlu0 %924
      %v930 = vsel %vm326, %v496, %v919
      %v931 = vsel %vm326, %v501, %v921
      %v932 = vsel %vm326, %v506, %v923
      %v933 = vsel %vm326, %v511, %v925
      %938 = vrot.lane.b32.xlu0 %v910, 34
      %v939 = vpop.permute.xlu0 %938
      %940 = vrot.lane.b32.xlu0 %v911, 34
      %v941 = vpop.permute.xlu0 %940
      %942 = vrot.lane.b32.xlu0 %v912, 34
      %v943 = vpop.permute.xlu0 %942
      %944 = vrot.lane.b32.xlu0 %v913, 34
      %v945 = vpop.permute.xlu0 %944
      %954 = vrot.lane.b32.xlu0 %v930, 68
      %v955 = vpop.permute.xlu0 %954
      %956 = vrot.lane.b32.xlu0 %v931, 68
      %v957 = vpop.permute.xlu0 %956
      %958 = vrot.lane.b32.xlu0 %v932, 68
      %v959 = vpop.permute.xlu0 %958
      %960 = vrot.lane.b32.xlu0 %v933, 68
      %v961 = vpop.permute.xlu0 %960
      %v966 = vsel %vm546, %v890, %v939
      %v967 = vsel %vm546, %v891, %v941
      %v968 = vsel %vm546, %v892, %v943
      %v969 = vsel %vm546, %v893, %v945
      %v970 = vsel %vm551, %v966, %v955
      %v971 = vsel %vm551, %v967, %v957
      %v972 = vsel %vm551, %v968, %v959
      %v973 = vsel %vm551, %v969, %v961
      %986 = vrot.lane.b32.xlu0 %v556, 64
      %v987 = vpop.permute.xlu0 %986
      %988 = vrot.lane.b32.xlu0 %v557, 64
      %v989 = vpop.permute.xlu0 %988
      %990 = vrot.lane.b32.xlu0 %v558, 64
      %v991 = vpop.permute.xlu0 %990
      %992 = vrot.lane.b32.xlu0 %v559, 64
      %v993 = vpop.permute.xlu0 %992
      %994 = vrot.lane.b32.xlu0 %v560, 64
      %v995 = vpop.permute.xlu0 %994
      %996 = vrot.lane.b32.xlu0 %v561, 64
      %v997 = vpop.permute.xlu0 %996
      %998 = vrot.lane.b32.xlu0 %v562, 64
      %v999 = vpop.permute.xlu0 %998
      %1000 = vrot.lane.b32.xlu0 %v563, 64
      %v1001 = vpop.permute.xlu0 %1000
      %1002 = vrot.lane.b32.xlu0 %v564, 64
      %v1003 = vpop.permute.xlu0 %1002
      %1004 = vrot.lane.b32.xlu0 %v565, 64
      %v1005 = vpop.permute.xlu0 %1004
      %1006 = vrot.lane.b32.xlu0 %v566, 64
      %v1007 = vpop.permute.xlu0 %1006
      %1008 = vrot.lane.b32.xlu0 %v567, 64
      %v1009 = vpop.permute.xlu0 %1008
      %1010 = vrot.lane.b32.xlu0 %v568, 64
      %v1011 = vpop.permute.xlu0 %1010
      %1025 = vrot.lane.b32.xlu0 %v573, 64
      %v1026 = vpop.permute.xlu0 %1025
      %v1029 = vsel %vm574, %v970, 0
      %v1032 = vsel %vm574, %v971, 0
      %v1035 = vsel %vm574, %v972, 0
      %v1038 = vsel %vm574, %v973, 0
      %v1040 = vsel %vm587, %v1011, 0
      %1042 = vmatprep.subr.mxu0 0.0
      %1043 = vmatpush1.msra.mxu0 %v987
      %1044 = vmatprep.subr.mxu0 0.0
      %1045 = vmatpush1.msra.mxu0 %v989
      %1046 = vmatprep.subr.mxu0 0.0
      %1047 = vmatpush1.msra.mxu0 %v991
      %1048 = vmatprep.subr.mxu0 0.0
      %1049 = vmatpush1.msra.mxu0 %v993
      %1050 = vmatprep.subr.mxu0 0.0
      %1051 = vmatpush1.msra.mxu0 %v995
      %1052 = vmatprep.subr.mxu0 0.0
      %1053 = vmatpush1.msra.mxu0 %v997
      %1054 = vmatprep.subr.mxu0 0.0
      %1055 = vmatpush1.msra.mxu0 %v999
      %1056 = vmatprep.subr.mxu0 0.0
      %1057 = vmatpush1.msra.mxu0 %v1001
      %1058 = vmatprep.subr.mxu0 0.0
      %1059 = vmatpush1.msra.mxu0 %v1003
      %1060 = vmatprep.subr.mxu0 0.0
      %1061 = vmatpush1.msra.mxu0 %v1005
      %1062 = vmatprep.subr.mxu0 0.0
      %1063 = vmatpush1.msra.mxu0 %v1007
      %1064 = vmatprep.subr.mxu0 0.0
      %1065 = vmatpush1.msra.mxu0 %v1009
      %1066 = vmatprep.subr.mxu0 0.0
      %1067 = vmatpush1.msra.mxu0 %v1040
      %1068 = vmatprep.subr.mxu0 0.0
      %1069 = vmatpush1.msra.mxu0 0.0
      %1070 = vmatprep.subr.mxu0 0.0
      %1071 = vmatpush1.msra.mxu0 0.0
      %1072 = vmatprep.subr.mxu0 0.0
      %1073 = vmatpush1.msra.mxu0 0.0
      %1074 = vmatprep.subr.mxu0 0.0
      %1075 = vmatpush1.msra.mxu0 0.0
      %1076 = vmatprep.subr.mxu0 0.0
      %1077 = vmatpush1.msra.mxu0 0.0
      %1078 = vmatprep.subr.mxu0 0.0
      %1079 = vmatpush1.msra.mxu0 0.0
      %1080 = vmatprep.subr.mxu0 0.0
      %1081 = vmatpush1.msra.mxu0 0.0
      %1082 = vmatprep.subr.mxu0 0.0
      %1083 = vmatpush1.msra.mxu0 0.0
      %1084 = vmatprep.subr.mxu0 0.0
      %1085 = vmatpush1.msra.mxu0 0.0
      %1086 = vmatprep.subr.mxu0 0.0
      %1087 = vmatpush1.msra.mxu0 0.0
      %1088 = vmatprep.subr.mxu0 0.0
      %1089 = vmatpush1.msra.mxu0 0.0
      %1090 = vmatprep.subr.mxu0 0.0
      %1091 = vmatpush1.msra.mxu0 0.0
      %1092 = vmatprep.subr.mxu0 0.0
      %1093 = vmatpush1.msra.mxu0 0.0
      %1094 = vmatprep.subr.mxu0 0.0
      %1095 = vmatpush1.msra.mxu0 0.0
      %1096 = vmatprep.subr.mxu0 0.0
      %1097 = vmatpush1.msra.mxu0 0.0
      %1098 = vmatprep.subr.mxu0 0.0
      %1099 = vmatpush1.msra.mxu0 0.0
      %1100 = vmatprep.subr.mxu0 0.0
      %1101 = vmatpush1.msra.mxu0 0.0
      %1102 = vmatprep.subr.mxu0 0.0
      %1103 = vmatpush1.msra.mxu0 0.0
      %1104 = vmatprep.subr.mxu0 0.0
      %1105 = vmatpush1.msra.mxu0 0.0
      %1106 = vmatprep.mubr.f32.mxu0 0.0
      %1107 = vmatmul.mubr.f32.gmra.mrb[0].mxu0 %v1029
      %v1108 = vpop.f32.mrb[0].mxu0
      %v1109 = vadd.f32 %v1026, %v1108
      %v1110 = vpop.f32.mrb[0].mxu0
      %1111 = vmatprep.mubr.f32.mxu0 0.0
      %1112 = vmatmul.mubr.f32.gmra.mrb[0].mxu0 %v1032
      %v1113 = vpop.f32.mrb[0].mxu0
      %v1114 = vadd.f32 %v1026, %v1113
      %v1115 = vpop.f32.mrb[0].mxu0
      %1116 = vmatprep.mubr.f32.mxu0 0.0
      %1117 = vmatmul.mubr.f32.gmra.mrb[0].mxu0 %v1035
      %v1118 = vpop.f32.mrb[0].mxu0
      %v1119 = vadd.f32 %v1026, %v1118
      %v1120 = vpop.f32.mrb[0].mxu0
      %1121 = vmatprep.mubr.f32.mxu0 0.0
      %1122 = vmatmul.mubr.f32.gmra.mrb[0].mxu0 %v1038
      %v1123 = vpop.f32.mrb[0].mxu0
      %v1124 = vadd.f32 %v1026, %v1123
      %v1125 = vpop.f32.mrb[0].mxu0
      %1126 = vdwg.mxu0
      %v1127 = vtanh.pop %v1109
      %v1128 = vtanh.pop %v1114
      %v1129 = vtanh.pop %v1119
      %v1130 = vtanh.pop %v1124
      %1131 = vrot.lane.b32.xlu0 %v306, 32
      %v1132 = vpop.permute.xlu0 %1131
      %1133 = vrot.lane.b32.xlu0 %v307, 32
      %v1134 = vpop.permute.xlu0 %1133
      %1135 = vrot.lane.b32.xlu0 %v308, 32
      %v1136 = vpop.permute.xlu0 %1135
      %1137 = vrot.lane.b32.xlu0 %v309, 32
      %v1138 = vpop.permute.xlu0 %1137
      %v1143 = vmul.f32 %v693, %v1132
      %v1144 = vmul.f32 %v695, %v1134
      %v1145 = vmul.f32 %v697, %v1136
      %v1146 = vmul.f32 %v699, %v1138
      %v1147 = vsub.f32 1.0, %v693
      %v1148 = vsub.f32 1.0, %v695
      %v1149 = vsub.f32 1.0, %v697
      %v1150 = vsub.f32 1.0, %v699
      %1155 = vrot.lane.b32.xlu0 %v1127, 32
      %v1156 = vpop.permute.xlu0 %1155
      %1157 = vrot.lane.b32.xlu0 %v1128, 32
      %v1158 = vpop.permute.xlu0 %1157
      %1159 = vrot.lane.b32.xlu0 %v1129, 32
      %v1160 = vpop.permute.xlu0 %1159
      %1161 = vrot.lane.b32.xlu0 %v1130, 32
      %v1162 = vpop.permute.xlu0 %1161
      %v1167 = vmul.f32 %v1147, %v1156
      %v1168 = vmul.f32 %v1148, %v1158
      %v1169 = vmul.f32 %v1149, %v1160
      %v1170 = vmul.f32 %v1150, %v1162
      %v1171 = vadd.f32 %v1143, %v1167
      %v1172 = vadd.f32 %v1144, %v1168
      %v1173 = vadd.f32 %v1145, %v1169
      %v1174 = vadd.f32 %v1146, %v1170
      %1179 = vrot.lane.b32.xlu0 %v1171, 96
      %v1180 = vpop.permute.xlu0 %1179
      %1181 = vrot.lane.b32.xlu0 %v1172, 96
      %v1182 = vpop.permute.xlu0 %1181
      %1183 = vrot.lane.b32.xlu0 %v1173, 96
      %v1184 = vpop.permute.xlu0 %1183
      %1185 = vrot.lane.b32.xlu0 %v1174, 96
      %v1186 = vpop.permute.xlu0 %1185
      %1191 = vst.msk [vmem:[#allocation2] sm:$0xff] %vm331, %v1180
      %1192 = vst.msk [vmem:[#allocation2 + $0x8] sm:$0xff] %vm331, %v1182
      %1193 = vst.msk [vmem:[#allocation2 + $0x10] sm:$0xff] %vm331, %v1184
      %1194 = vst.msk [vmem:[#allocation2 + $0x18] sm:$0xff] %vm331, %v1186
      %s1195 = scalar_lea.vmem [#allocation2], 32
      %v1196 = vld [vmem:[%s1195] sm:$0xff]
      %v1197 = vld [vmem:[%s1195 + $0x8] sm:$0xff]
      %v1198 = vld [vmem:[%s1195 + $0x10] sm:$0xff]
      %v1199 = vld [vmem:[%s1195 + $0x18] sm:$0xff]
      %1204 = vrot.lane.b32.xlu0 %v1196, 32
      %v1205 = vpop.permute.xlu0 %1204
      %1206 = vrot.lane.b32.xlu0 %v1197, 32
      %v1207 = vpop.permute.xlu0 %1206
      %1208 = vrot.lane.b32.xlu0 %v1198, 32
      %v1209 = vpop.permute.xlu0 %1208
      %1210 = vrot.lane.b32.xlu0 %v1199, 32
      %v1211 = vpop.permute.xlu0 %1210
      %v1216 = vsel %vm331, %v1180, %v1205
      %v1217 = vsel %vm331, %v1182, %v1207
      %v1218 = vsel %vm331, %v1184, %v1209
      %v1219 = vsel %vm331, %v1186, %v1211
      %1220 = vmatprep.subr.mxu0 0.0
      %1221 = vmatpush1.msra.mxu0 %v1216
      %1222 = vmatprep.subr.mxu0 0.0
      %1223 = vmatpush1.msra.mxu0 %v1217
      %1224 = vmatprep.subr.mxu0 0.0
      %1225 = vmatpush1.msra.mxu0 %v1218
      %1226 = vmatprep.subr.mxu0 0.0
      %1227 = vmatpush1.msra.mxu0 %v1219
      %1228 = vmatprep.subr.mxu0 0.0
      %1229 = vmatpush1.msra.mxu0 0.0
      %1230 = vmatprep.subr.mxu0 0.0
      %1231 = vmatpush1.msra.mxu0 0.0
      %1232 = vmatprep.subr.mxu0 0.0
      %1233 = vmatpush1.msra.mxu0 0.0
      %1234 = vmatprep.subr.mxu0 0.0
      %1235 = vmatpush1.msra.mxu0 0.0
      %1236 = vmatprep.subr.mxu0 0.0
      %1237 = vmatpush1.msra.mxu0 0.0
      %1238 = vmatprep.subr.mxu0 0.0
      %1239 = vmatpush1.msra.mxu0 0.0
      %1240 = vmatprep.subr.mxu0 0.0
      %1241 = vmatpush1.msra.mxu0 0.0
      %1242 = vmatprep.subr.mxu0 0.0
      %1243 = vmatpush1.msra.mxu0 0.0
      %1244 = vmatprep.subr.mxu0 0.0
      %1245 = vmatpush1.msra.mxu0 0.0
      %1246 = vmatprep.subr.mxu0 0.0
      %1247 = vmatpush1.msra.mxu0 0.0
      %1248 = vmatprep.subr.mxu0 0.0
      %1249 = vmatpush1.msra.mxu0 0.0
      %1250 = vmatprep.subr.mxu0 0.0
      %1251 = vmatpush1.msra.mxu0 0.0
      %1252 = vmatprep.subr.mxu0 0.0
      %1253 = vmatpush1.msra.mxu0 0.0
      %1254 = vmatprep.subr.mxu0 0.0
      %1255 = vmatpush1.msra.mxu0 0.0
      %1256 = vmatprep.subr.mxu0 0.0
      %1257 = vmatpush1.msra.mxu0 0.0
      %1258 = vmatprep.subr.mxu0 0.0
      %1259 = vmatpush1.msra.mxu0 0.0
      %1260 = vmatprep.subr.mxu0 0.0
      %1261 = vmatpush1.msra.mxu0 0.0
      %1262 = vmatprep.subr.mxu0 0.0
      %1263 = vmatpush1.msra.mxu0 0.0
      %1264 = vmatprep.subr.mxu0 0.0
      %1265 = vmatpush1.msra.mxu0 0.0
      %1266 = vmatprep.subr.mxu0 0.0
      %1267 = vmatpush1.msra.mxu0 0.0
      %1268 = vmatprep.subr.mxu0 0.0
      %1269 = vmatpush1.msra.mxu0 0.0
      %1270 = vmatprep.subr.mxu0 0.0
      %1271 = vmatpush1.msra.mxu0 0.0
      %1272 = vmatprep.subr.mxu0 0.0
      %1273 = vmatpush1.msra.mxu0 0.0
      %1274 = vmatprep.subr.mxu0 0.0
      %1275 = vmatpush1.msra.mxu0 0.0
      %1276 = vmatprep.subr.mxu0 0.0
      %1277 = vmatpush1.msra.mxu0 0.0
      %1278 = vmatprep.subr.mxu0 0.0
      %1279 = vmatpush1.msra.mxu0 0.0
      %1280 = vmatprep.subr.mxu0 0.0
      %1281 = vmatpush1.msra.mxu0 0.0
      %1282 = vmatprep.subr.mxu0 0.0
      %1283 = vmatpush1.msra.mxu0 0.0
      %1284 = vmatprep.mubr.f32.mxu0 0.0
      %1285 = vmatmul.mubr.f32.gmra.mrb[0].mxu0 %v333
      %v1286 = vpop.f32.mrb[0].mxu0
      %v1287 = vadd.f32 0.0, %v1286
      %v1288 = vpop.f32.mrb[0].mxu0
      %1289 = vmatprep.mubr.f32.mxu0 0.0
      %1290 = vmatmul.mubr.f32.gmra.mrb[0].mxu0 %v336
      %v1291 = vpop.f32.mrb[0].mxu0
      %v1292 = vadd.f32 0.0, %v1291
      %v1293 = vpop.f32.mrb[0].mxu0
      %1294 = vmatprep.mubr.f32.mxu0 0.0
      %1295 = vmatmul.mubr.f32.gmra.mrb[0].mxu0 %v339
      %v1296 = vpop.f32.mrb[0].mxu0
      %v1297 = vadd.f32 0.0, %v1296
      %v1298 = vpop.f32.mrb[0].mxu0
      %1299 = vmatprep.mubr.f32.mxu0 0.0
      %1300 = vmatmul.mubr.f32.gmra.mrb[0].mxu0 %v342
      %v1301 = vpop.f32.mrb[0].mxu0
      %v1302 = vadd.f32 0.0, %v1301
      %v1303 = vpop.f32.mrb[0].mxu0
      %1304 = vdwg.mxu0
      %1305 = vmatprep.subr.mxu0 0.0
      %1306 = vmatpush1.msra.mxu0 %v1287
      %1307 = vmatprep.subr.mxu0 0.0
      %1308 = vmatpush1.msra.mxu0 %v1292
      %1309 = vmatprep.subr.mxu0 0.0
      %1310 = vmatpush1.msra.mxu0 %v1297
      %1311 = vmatprep.subr.mxu0 0.0
      %1312 = vmatpush1.msra.mxu0 %v1302
      %1313 = vmatprep.subr.mxu0 0.0
      %1314 = vmatpush1.msra.mxu0 0.0
      %1315 = vmatprep.subr.mxu0 0.0
      %1316 = vmatpush1.msra.mxu0 0.0
      %1317 = vmatprep.subr.mxu0 0.0
      %1318 = vmatpush1.msra.mxu0 0.0
      %1319 = vmatprep.subr.mxu0 0.0
      %1320 = vmatpush1.msra.mxu0 0.0
      %1321 = vmatprep.subr.mxu0 0.0
      %1322 = vmatpush1.msra.mxu0 0.0
      %1323 = vmatprep.subr.mxu0 0.0
      %1324 = vmatpush1.msra.mxu0 0.0
      %1325 = vmatprep.subr.mxu0 0.0
      %1326 = vmatpush1.msra.mxu0 0.0
      %1327 = vmatprep.subr.mxu0 0.0
      %1328 = vmatpush1.msra.mxu0 0.0
      %1329 = vmatprep.subr.mxu0 0.0
      %1330 = vmatpush1.msra.mxu0 0.0
      %1331 = vmatprep.subr.mxu0 0.0
      %1332 = vmatpush1.msra.mxu0 0.0
      %1333 = vmatprep.subr.mxu0 0.0
      %1334 = vmatpush1.msra.mxu0 0.0
      %1335 = vmatprep.subr.mxu0 0.0
      %1336 = vmatpush1.msra.mxu0 0.0
      %1337 = vmatprep.subr.mxu0 0.0
      %1338 = vmatpush1.msra.mxu0 0.0
      %1339 = vmatprep.subr.mxu0 0.0
      %1340 = vmatpush1.msra.mxu0 0.0
      %1341 = vmatprep.subr.mxu0 0.0
      %1342 = vmatpush1.msra.mxu0 0.0
      %1343 = vmatprep.subr.mxu0 0.0
      %1344 = vmatpush1.msra.mxu0 0.0
      %1345 = vmatprep.subr.mxu0 0.0
      %1346 = vmatpush1.msra.mxu0 0.0
      %1347 = vmatprep.subr.mxu0 0.0
      %1348 = vmatpush1.msra.mxu0 0.0
      %1349 = vmatprep.subr.mxu0 0.0
      %1350 = vmatpush1.msra.mxu0 0.0
      %1351 = vmatprep.subr.mxu0 0.0
      %1352 = vmatpush1.msra.mxu0 0.0
      %1353 = vmatprep.subr.mxu0 0.0
      %1354 = vmatpush1.msra.mxu0 0.0
      %1355 = vmatprep.subr.mxu0 0.0
      %1356 = vmatpush1.msra.mxu0 0.0
      %1357 = vmatprep.subr.mxu0 0.0
      %1358 = vmatpush1.msra.mxu0 0.0
      %1359 = vmatprep.subr.mxu0 0.0
      %1360 = vmatpush1.msra.mxu0 0.0
      %1361 = vmatprep.subr.mxu0 0.0
      %1362 = vmatpush1.msra.mxu0 0.0
      %1363 = vmatprep.subr.mxu0 0.0
      %1364 = vmatpush1.msra.mxu0 0.0
      %1365 = vmatprep.subr.mxu0 0.0
      %1366 = vmatpush1.msra.mxu0 0.0
      %1367 = vmatprep.subr.mxu0 0.0
      %1368 = vmatpush1.msra.mxu0 0.0
      %1369 = vmatprep.mubr.f32.mxu0 0.0
      %1370 = vmatmul.mubr.f32.gmra.mrb[0].mxu0 %v333
      %v1371 = vpop.f32.mrb[0].mxu0
      %v1372 = vadd.f32 0.0, %v1371
      %v1373 = vpop.f32.mrb[0].mxu0
      %1374 = vmatprep.mubr.f32.mxu0 0.0
      %1375 = vmatmul.mubr.f32.gmra.mrb[0].mxu0 %v336
      %v1376 = vpop.f32.mrb[0].mxu0
      %v1377 = vadd.f32 0.0, %v1376
      %v1378 = vpop.f32.mrb[0].mxu0
      %1379 = vmatprep.mubr.f32.mxu0 0.0
      %1380 = vmatmul.mubr.f32.gmra.mrb[0].mxu0 %v339
      %v1381 = vpop.f32.mrb[0].mxu0
      %v1382 = vadd.f32 0.0, %v1381
      %v1383 = vpop.f32.mrb[0].mxu0
      %1384 = vmatprep.mubr.f32.mxu0 0.0
      %1385 = vmatmul.mubr.f32.gmra.mrb[0].mxu0 %v342
      %v1386 = vpop.f32.mrb[0].mxu0
      %v1387 = vadd.f32 0.0, %v1386
      %v1388 = vpop.f32.mrb[0].mxu0
      %1389 = vdwg.mxu0
      %1394 = vrot.lane.b32.xlu0 %v1287, 64
      %v1395 = vpop.permute.xlu0 %1394
      %1396 = vrot.lane.b32.xlu0 %v1292, 64
      %v1397 = vpop.permute.xlu0 %1396
      %1398 = vrot.lane.b32.xlu0 %v1297, 64
      %v1399 = vpop.permute.xlu0 %1398
      %1400 = vrot.lane.b32.xlu0 %v1302, 64
      %v1401 = vpop.permute.xlu0 %1400
      %vm1406 = vcmask 523264
      %v1407 = vsel %vm1406, %v1216, %v1395
      %v1408 = vsel %vm1406, %v1217, %v1397
      %v1409 = vsel %vm1406, %v1218, %v1399
      %v1410 = vsel %vm1406, %v1219, %v1401
      %v1411 = vld [vmem:[%s4] sm:$0xff]
      %v1412 = vld [vmem:[%s4 + $0x8] sm:$0xff]
      %v1413 = vld [vmem:[%s4 + $0x10] sm:$0xff]
      %v1414 = vld [vmem:[%s4 + $0x18] sm:$0xff]
      %v1415 = vld [vmem:[%s4 + $0x20] sm:$0xff]
      %v1416 = vld [vmem:[%s4 + $0x28] sm:$0xff]
      %v1417 = vld [vmem:[%s4 + $0x30] sm:$0xff]
      %v1418 = vld [vmem:[%s4 + $0x38] sm:$0xff]
      %v1419 = vld [vmem:[%s4 + $0x40] sm:$0xff]
      %v1420 = vld [vmem:[%s4 + $0x48] sm:$0xff]
      %v1421 = vld [vmem:[%s4 + $0x50] sm:$0xff]
      %v1422 = vld [vmem:[%s4 + $0x58] sm:$0xff]
      %v1423 = vld [vmem:[%s4 + $0x60] sm:$0xff]
      %v1424 = vld [vmem:[%s4 + $0x68] sm:$0xff]
      %v1425 = vld [vmem:[%s4 + $0x70] sm:$0xff]
      %v1426 = vld [vmem:[%s4 + $0x78] sm:$0xff]
      %v1427 = vld [vmem:[%s4 + $0x80] sm:$0xff]
      %v1428 = vld [vmem:[%s4 + $0x88] sm:$0xff]
      %v1429 = vld [vmem:[%s4 + $0x90] sm:$0xff]
      %v1430 = vld [vmem:[%s4 + $0x98] sm:$0xff]
      %v1431 = vld [vmem:[%s4 + $0xa0] sm:$0xff]
      %v1432 = vld [vmem:[%s4 + $0xa8] sm:$0xff]
      %v1433 = vld [vmem:[%s4 + $0xb0] sm:$0xff]
      %v1434 = vld [vmem:[%s4 + $0xb8] sm:$0xff]
      %v1435 = vld [vmem:[%s4 + $0xc0] sm:$0x1]
      %v1436 = vlaneseq
      %v1437 = vshrl.u32 %v1436, 7
      %v1438 = vsub.s32 0, %v1437
      %v1439 = vrot.slane %v1435, %v1438
      %v1441 = vsel %vm1406, %v1372, 0
      %v1444 = vsel %vm1406, %v1377, 0
      %v1447 = vsel %vm1406, %v1382, 0
      %v1450 = vsel %vm1406, %v1387, 0
      %1452 = vmatprep.subr.mxu0 0.0
      %1453 = vmatpush1.msra.mxu0 %v1411
      %1454 = vmatprep.subr.mxu0 0.0
      %1455 = vmatpush1.msra.mxu0 %v1412
      %1456 = vmatprep.subr.mxu0 0.0
      %1457 = vmatpush1.msra.mxu0 %v1413
      %1458 = vmatprep.subr.mxu0 0.0
      %1459 = vmatpush1.msra.mxu0 %v1414
      %1460 = vmatprep.subr.mxu0 0.0
      %1461 = vmatpush1.msra.mxu0 %v1415
      %1462 = vmatprep.subr.mxu0 0.0
      %1463 = vmatpush1.msra.mxu0 %v1416
      %1464 = vmatprep.subr.mxu0 0.0
      %1465 = vmatpush1.msra.mxu0 %v1417
      %1466 = vmatprep.subr.mxu0 0.0
      %1467 = vmatpush1.msra.mxu0 %v1418
      %1468 = vmatprep.subr.mxu0 0.0
      %1469 = vmatpush1.msra.mxu0 %v1419
      %1470 = vmatprep.subr.mxu0 0.0
      %1471 = vmatpush1.msra.mxu0 %v1420
      %1472 = vmatprep.subr.mxu0 0.0
      %1473 = vmatpush1.msra.mxu0 %v1421
      %1474 = vmatprep.subr.mxu0 0.0
      %1475 = vmatpush1.msra.mxu0 %v1422
      %1476 = vmatprep.subr.mxu0 0.0
      %1477 = vmatpush1.msra.mxu0 %v1423
      %1478 = vmatprep.subr.mxu0 0.0
      %1479 = vmatpush1.msra.mxu0 %v1424
      %1480 = vmatprep.subr.mxu0 0.0
      %1481 = vmatpush1.msra.mxu0 %v1425
      %1482 = vmatprep.subr.mxu0 0.0
      %1483 = vmatpush1.msra.mxu0 %v1426
      %1484 = vmatprep.subr.mxu0 0.0
      %1485 = vmatpush1.msra.mxu0 %v1427
      %1486 = vmatprep.subr.mxu0 0.0
      %1487 = vmatpush1.msra.mxu0 %v1428
      %1488 = vmatprep.subr.mxu0 0.0
      %1489 = vmatpush1.msra.mxu0 %v1429
      %1490 = vmatprep.subr.mxu0 0.0
      %1491 = vmatpush1.msra.mxu0 %v1430
      %1492 = vmatprep.subr.mxu0 0.0
      %1493 = vmatpush1.msra.mxu0 %v1431
      %1494 = vmatprep.subr.mxu0 0.0
      %1495 = vmatpush1.msra.mxu0 %v1432
      %1496 = vmatprep.subr.mxu0 0.0
      %1497 = vmatpush1.msra.mxu0 %v1433
      %1498 = vmatprep.subr.mxu0 0.0
      %1499 = vmatpush1.msra.mxu0 %v1434
      %1500 = vmatprep.subr.mxu0 0.0
      %1501 = vmatpush1.msra.mxu0 0.0
      %1502 = vmatprep.subr.mxu0 0.0
      %1503 = vmatpush1.msra.mxu0 0.0
      %1504 = vmatprep.subr.mxu0 0.0
      %1505 = vmatpush1.msra.mxu0 0.0
      %1506 = vmatprep.subr.mxu0 0.0
      %1507 = vmatpush1.msra.mxu0 0.0
      %1508 = vmatprep.subr.mxu0 0.0
      %1509 = vmatpush1.msra.mxu0 0.0
      %1510 = vmatprep.subr.mxu0 0.0
      %1511 = vmatpush1.msra.mxu0 0.0
      %1512 = vmatprep.subr.mxu0 0.0
      %1513 = vmatpush1.msra.mxu0 0.0
      %1514 = vmatprep.subr.mxu0 0.0
      %1515 = vmatpush1.msra.mxu0 0.0
      %1516 = vmatprep.mubr.f32.mxu0 %v1441
      %1517 = vmatmul.mubr.f32.gmra.mrb[0].mxu0 %v1407
      %v1518 = vpop.f32.mrb[0].mxu0
      %v1519 = vadd.f32 %v1439, %v1518
      %v1520 = vpop.f32.mrb[0].mxu0
      %1521 = vmatprep.mubr.f32.mxu0 %v1444
      %1522 = vmatmul.mubr.f32.gmra.mrb[0].mxu0 %v1408
      %v1523 = vpop.f32.mrb[0].mxu0
      %v1524 = vadd.f32 %v1439, %v1523
      %v1525 = vpop.f32.mrb[0].mxu0
      %1526 = vmatprep.mubr.f32.mxu0 %v1447
      %1527 = vmatmul.mubr.f32.gmra.mrb[0].mxu0 %v1409
      %v1528 = vpop.f32.mrb[0].mxu0
      %v1529 = vadd.f32 %v1439, %v1528
      %v1530 = vpop.f32.mrb[0].mxu0
      %1531 = vmatprep.mubr.f32.mxu0 %v1450
      %1532 = vmatmul.mubr.f32.gmra.mrb[0].mxu0 %v1410
      %v1533 = vpop.f32.mrb[0].mxu0
      %v1534 = vadd.f32 %v1439, %v1533
      %v1535 = vpop.f32.mrb[0].mxu0
      %1536 = vdwg.mxu0
      %v1537 = vxor.u32 %v1519, 2147483648
      %v1538 = vxor.u32 %v1524, 2147483648
      %v1539 = vxor.u32 %v1529, 2147483648
      %v1540 = vxor.u32 %v1534, 2147483648
      %v1541 = vmul.f32 %v1537, 1.442695
      %v1542 = vpow.pop %v1541
      %v1543 = vmul.f32 %v1538, 1.442695
      %v1544 = vpow.pop %v1543
      %v1545 = vmul.f32 %v1539, 1.442695
      %v1546 = vpow.pop %v1545
      %v1547 = vmul.f32 %v1540, 1.442695
      %v1548 = vpow.pop %v1547
      %v1549 = vadd.f32 %v1542, 1.0
      %v1550 = vadd.f32 %v1544, 1.0
      %v1551 = vadd.f32 %v1546, 1.0
      %v1552 = vadd.f32 %v1548, 1.0
      %v1553 = vrcp.pop %v1549
      %v1554 = vmul.f32 1.0, %v1553
      %v1555 = vrcp.pop %v1550
      %v1556 = vmul.f32 1.0, %v1555
      %v1557 = vrcp.pop %v1551
      %v1558 = vmul.f32 1.0, %v1557
      %v1559 = vrcp.pop %v1552
      %v1560 = vmul.f32 1.0, %v1559
      %v1561 = vmul.f32 %v1554, %v1196
      %v1562 = vmul.f32 %v1556, %v1197
      %v1563 = vmul.f32 %v1558, %v1198
      %v1564 = vmul.f32 %v1560, %v1199
      %1565 = vmatprep.subr.mxu0 0.0
      %1566 = vmatpush1.msra.mxu0 %v1561
      %1567 = vmatprep.subr.mxu0 0.0
      %1568 = vmatpush1.msra.mxu0 %v1562
      %1569 = vmatprep.subr.mxu0 0.0
      %1570 = vmatpush1.msra.mxu0 %v1563
      %1571 = vmatprep.subr.mxu0 0.0
      %1572 = vmatpush1.msra.mxu0 %v1564
      %1573 = vmatprep.subr.mxu0 0.0
      %1574 = vmatpush1.msra.mxu0 0.0
      %1575 = vmatprep.subr.mxu0 0.0
      %1576 = vmatpush1.msra.mxu0 0.0
      %1577 = vmatprep.subr.mxu0 0.0
      %1578 = vmatpush1.msra.mxu0 0.0
      %1579 = vmatprep.subr.mxu0 0.0
      %1580 = vmatpush1.msra.mxu0 0.0
      %1581 = vmatprep.subr.mxu0 0.0
      %1582 = vmatpush1.msra.mxu0 0.0
      %1583 = vmatprep.subr.mxu0 0.0
      %1584 = vmatpush1.msra.mxu0 0.0
      %1585 = vmatprep.subr.mxu0 0.0
      %1586 = vmatpush1.msra.mxu0 0.0
      %1587 = vmatprep.subr.mxu0 0.0
      %1588 = vmatpush1.msra.mxu0 0.0
      %1589 = vmatprep.subr.mxu0 0.0
      %1590 = vmatpush1.msra.mxu0 0.0
      %1591 = vmatprep.subr.mxu0 0.0
      %1592 = vmatpush1.msra.mxu0 0.0
      %1593 = vmatprep.subr.mxu0 0.0
      %1594 = vmatpush1.msra.mxu0 0.0
      %1595 = vmatprep.subr.mxu0 0.0
      %1596 = vmatpush1.msra.mxu0 0.0
      %1597 = vmatprep.subr.mxu0 0.0
      %1598 = vmatpush1.msra.mxu0 0.0
      %1599 = vmatprep.subr.mxu0 0.0
      %1600 = vmatpush1.msra.mxu0 0.0
      %1601 = vmatprep.subr.mxu0 0.0
      %1602 = vmatpush1.msra.mxu0 0.0
      %1603 = vmatprep.subr.mxu0 0.0
      %1604 = vmatpush1.msra.mxu0 0.0
      %1605 = vmatprep.subr.mxu0 0.0
      %1606 = vmatpush1.msra.mxu0 0.0
      %1607 = vmatprep.subr.mxu0 0.0
      %1608 = vmatpush1.msra.mxu0 0.0
      %1609 = vmatprep.subr.mxu0 0.0
      %1610 = vmatpush1.msra.mxu0 0.0
      %1611 = vmatprep.subr.mxu0 0.0
      %1612 = vmatpush1.msra.mxu0 0.0
      %1613 = vmatprep.subr.mxu0 0.0
      %1614 = vmatpush1.msra.mxu0 0.0
      %1615 = vmatprep.subr.mxu0 0.0
      %1616 = vmatpush1.msra.mxu0 0.0
      %1617 = vmatprep.subr.mxu0 0.0
      %1618 = vmatpush1.msra.mxu0 0.0
      %1619 = vmatprep.subr.mxu0 0.0
      %1620 = vmatpush1.msra.mxu0 0.0
      %1621 = vmatprep.subr.mxu0 0.0
      %1622 = vmatpush1.msra.mxu0 0.0
      %1623 = vmatprep.subr.mxu0 0.0
      %1624 = vmatpush1.msra.mxu0 0.0
      %1625 = vmatprep.subr.mxu0 0.0
      %1626 = vmatpush1.msra.mxu0 0.0
      %1627 = vmatprep.subr.mxu0 0.0
      %1628 = vmatpush1.msra.mxu0 0.0
      %1629 = vmatprep.mubr.f32.mxu0 0.0
      %1630 = vmatmul.mubr.f32.gmra.mrb[0].mxu0 %v333
      %v1631 = vpop.f32.mrb[0].mxu0
      %v1632 = vadd.f32 0.0, %v1631
      %v1633 = vpop.f32.mrb[0].mxu0
      %1634 = vmatprep.mubr.f32.mxu0 0.0
      %1635 = vmatmul.mubr.f32.gmra.mrb[0].mxu0 %v336
      %v1636 = vpop.f32.mrb[0].mxu0
      %v1637 = vadd.f32 0.0, %v1636
      %v1638 = vpop.f32.mrb[0].mxu0
      %1639 = vmatprep.mubr.f32.mxu0 0.0
      %1640 = vmatmul.mubr.f32.gmra.mrb[0].mxu0 %v339
      %v1641 = vpop.f32.mrb[0].mxu0
      %v1642 = vadd.f32 0.0, %v1641
      %v1643 = vpop.f32.mrb[0].mxu0
      %1644 = vmatprep.mubr.f32.mxu0 0.0
      %1645 = vmatmul.mubr.f32.gmra.mrb[0].mxu0 %v342
      %v1646 = vpop.f32.mrb[0].mxu0
      %v1647 = vadd.f32 0.0, %v1646
      %v1648 = vpop.f32.mrb[0].mxu0
      %1649 = vdwg.mxu0
      %1650 = vmatprep.subr.mxu0 0.0
      %1651 = vmatpush1.msra.mxu0 %v1632
      %1652 = vmatprep.subr.mxu0 0.0
      %1653 = vmatpush1.msra.mxu0 %v1637
      %1654 = vmatprep.subr.mxu0 0.0
      %1655 = vmatpush1.msra.mxu0 %v1642
      %1656 = vmatprep.subr.mxu0 0.0
      %1657 = vmatpush1.msra.mxu0 %v1647
      %1658 = vmatprep.subr.mxu0 0.0
      %1659 = vmatpush1.msra.mxu0 0.0
      %1660 = vmatprep.subr.mxu0 0.0
      %1661 = vmatpush1.msra.mxu0 0.0
      %1662 = vmatprep.subr.mxu0 0.0
      %1663 = vmatpush1.msra.mxu0 0.0
      %1664 = vmatprep.subr.mxu0 0.0
      %1665 = vmatpush1.msra.mxu0 0.0
      %1666 = vmatprep.subr.mxu0 0.0
      %1667 = vmatpush1.msra.mxu0 0.0
      %1668 = vmatprep.subr.mxu0 0.0
      %1669 = vmatpush1.msra.mxu0 0.0
      %1670 = vmatprep.subr.mxu0 0.0
      %1671 = vmatpush1.msra.mxu0 0.0
      %1672 = vmatprep.subr.mxu0 0.0
      %1673 = vmatpush1.msra.mxu0 0.0
      %1674 = vmatprep.subr.mxu0 0.0
      %1675 = vmatpush1.msra.mxu0 0.0
      %1676 = vmatprep.subr.mxu0 0.0
      %1677 = vmatpush1.msra.mxu0 0.0
      %1678 = vmatprep.subr.mxu0 0.0
      %1679 = vmatpush1.msra.mxu0 0.0
      %1680 = vmatprep.subr.mxu0 0.0
      %1681 = vmatpush1.msra.mxu0 0.0
      %1682 = vmatprep.subr.mxu0 0.0
      %1683 = vmatpush1.msra.mxu0 0.0
      %1684 = vmatprep.subr.mxu0 0.0
      %1685 = vmatpush1.msra.mxu0 0.0
      %1686 = vmatprep.subr.mxu0 0.0
      %1687 = vmatpush1.msra.mxu0 0.0
      %1688 = vmatprep.subr.mxu0 0.0
      %1689 = vmatpush1.msra.mxu0 0.0
      %1690 = vmatprep.subr.mxu0 0.0
      %1691 = vmatpush1.msra.mxu0 0.0
      %1692 = vmatprep.subr.mxu0 0.0
      %1693 = vmatpush1.msra.mxu0 0.0
      %1694 = vmatprep.subr.mxu0 0.0
      %1695 = vmatpush1.msra.mxu0 0.0
      %1696 = vmatprep.subr.mxu0 0.0
      %1697 = vmatpush1.msra.mxu0 0.0
      %1698 = vmatprep.subr.mxu0 0.0
      %1699 = vmatpush1.msra.mxu0 0.0
      %1700 = vmatprep.subr.mxu0 0.0
      %1701 = vmatpush1.msra.mxu0 0.0
      %1702 = vmatprep.subr.mxu0 0.0
      %1703 = vmatpush1.msra.mxu0 0.0
      %1704 = vmatprep.subr.mxu0 0.0
      %1705 = vmatpush1.msra.mxu0 0.0
      %1706 = vmatprep.subr.mxu0 0.0
      %1707 = vmatpush1.msra.mxu0 0.0
      %1708 = vmatprep.subr.mxu0 0.0
      %1709 = vmatpush1.msra.mxu0 0.0
      %1710 = vmatprep.subr.mxu0 0.0
      %1711 = vmatpush1.msra.mxu0 0.0
      %1712 = vmatprep.subr.mxu0 0.0
      %1713 = vmatpush1.msra.mxu0 0.0
      %1714 = vmatprep.mubr.f32.mxu0 0.0
      %1715 = vmatmul.mubr.f32.gmra.mrb[0].mxu0 %v333
      %v1716 = vpop.f32.mrb[0].mxu0
      %v1717 = vadd.f32 0.0, %v1716
      %v1718 = vpop.f32.mrb[0].mxu0
      %1719 = vmatprep.mubr.f32.mxu0 0.0
      %1720 = vmatmul.mubr.f32.gmra.mrb[0].mxu0 %v336
      %v1721 = vpop.f32.mrb[0].mxu0
      %v1722 = vadd.f32 0.0, %v1721
      %v1723 = vpop.f32.mrb[0].mxu0
      %1724 = vmatprep.mubr.f32.mxu0 0.0
      %1725 = vmatmul.mubr.f32.gmra.mrb[0].mxu0 %v339
      %v1726 = vpop.f32.mrb[0].mxu0
      %v1727 = vadd.f32 0.0, %v1726
      %v1728 = vpop.f32.mrb[0].mxu0
      %1729 = vmatprep.mubr.f32.mxu0 0.0
      %1730 = vmatmul.mubr.f32.gmra.mrb[0].mxu0 %v342
      %v1731 = vpop.f32.mrb[0].mxu0
      %v1732 = vadd.f32 0.0, %v1731
      %v1733 = vpop.f32.mrb[0].mxu0
      %1734 = vdwg.mxu0
      %1739 = vrot.lane.b32.xlu0 %v1561, 32
      %v1740 = vpop.permute.xlu0 %1739
      %1741 = vrot.lane.b32.xlu0 %v1562, 32
      %v1742 = vpop.permute.xlu0 %1741
      %1743 = vrot.lane.b32.xlu0 %v1563, 32
      %v1744 = vpop.permute.xlu0 %1743
      %1745 = vrot.lane.b32.xlu0 %v1564, 32
      %v1746 = vpop.permute.xlu0 %1745
      %v1751 = vsel %vm331, %v1216, %v1740
      %v1752 = vsel %vm331, %v1217, %v1742
      %v1753 = vsel %vm331, %v1218, %v1744
      %v1754 = vsel %vm331, %v1219, %v1746
      %1759 = vrot.lane.b32.xlu0 %v1632, 32
      %v1760 = vpop.permute.xlu0 %1759
      %1761 = vrot.lane.b32.xlu0 %v1637, 32
      %v1762 = vpop.permute.xlu0 %1761
      %1763 = vrot.lane.b32.xlu0 %v1642, 32
      %v1764 = vpop.permute.xlu0 %1763
      %1765 = vrot.lane.b32.xlu0 %v1647, 32
      %v1766 = vpop.permute.xlu0 %1765
      %v1771 = vsel %vm331, %v1287, %v1760
      %v1772 = vsel %vm331, %v1292, %v1762
      %v1773 = vsel %vm331, %v1297, %v1764
      %v1774 = vsel %vm331, %v1302, %v1766
      %1779 = vrot.lane.b32.xlu0 %v1717, 32
      %v1780 = vpop.permute.xlu0 %1779
      %1781 = vrot.lane.b32.xlu0 %v1722, 32
      %v1782 = vpop.permute.xlu0 %1781
      %1783 = vrot.lane.b32.xlu0 %v1727, 32
      %v1784 = vpop.permute.xlu0 %1783
      %1785 = vrot.lane.b32.xlu0 %v1732, 32
      %v1786 = vpop.permute.xlu0 %1785
      %v1791 = vsel %vm331, %v1372, %v1780
      %v1792 = vsel %vm331, %v1377, %v1782
      %v1793 = vsel %vm331, %v1382, %v1784
      %v1794 = vsel %vm331, %v1387, %v1786
      %1799 = vrot.lane.b32.xlu0 %v1771, 64
      %v1800 = vpop.permute.xlu0 %1799
      %1801 = vrot.lane.b32.xlu0 %v1772, 64
      %v1802 = vpop.permute.xlu0 %1801
      %1803 = vrot.lane.b32.xlu0 %v1773, 64
      %v1804 = vpop.permute.xlu0 %1803
      %1805 = vrot.lane.b32.xlu0 %v1774, 64
      %v1806 = vpop.permute.xlu0 %1805
      %v1811 = vsel %vm1406, %v1751, %v1800
      %v1812 = vsel %vm1406, %v1752, %v1802
      %v1813 = vsel %vm1406, %v1753, %v1804
      %v1814 = vsel %vm1406, %v1754, %v1806
      %1839 = vrot.lane.b32.xlu0 %v1411, 64
      %v1840 = vpop.permute.xlu0 %1839
      %1841 = vrot.lane.b32.xlu0 %v1412, 64
      %v1842 = vpop.permute.xlu0 %1841
      %1843 = vrot.lane.b32.xlu0 %v1413, 64
      %v1844 = vpop.permute.xlu0 %1843
      %1845 = vrot.lane.b32.xlu0 %v1414, 64
      %v1846 = vpop.permute.xlu0 %1845
      %1847 = vrot.lane.b32.xlu0 %v1415, 64
      %v1848 = vpop.permute.xlu0 %1847
      %1849 = vrot.lane.b32.xlu0 %v1416, 64
      %v1850 = vpop.permute.xlu0 %1849
      %1851 = vrot.lane.b32.xlu0 %v1417, 64
      %v1852 = vpop.permute.xlu0 %1851
      %1853 = vrot.lane.b32.xlu0 %v1418, 64
      %v1854 = vpop.permute.xlu0 %1853
      %1855 = vrot.lane.b32.xlu0 %v1419, 64
      %v1856 = vpop.permute.xlu0 %1855
      %1857 = vrot.lane.b32.xlu0 %v1420, 64
      %v1858 = vpop.permute.xlu0 %1857
      %1859 = vrot.lane.b32.xlu0 %v1421, 64
      %v1860 = vpop.permute.xlu0 %1859
      %1861 = vrot.lane.b32.xlu0 %v1422, 64
      %v1862 = vpop.permute.xlu0 %1861
      %1863 = vrot.lane.b32.xlu0 %v1423, 64
      %v1864 = vpop.permute.xlu0 %1863
      %1865 = vrot.lane.b32.xlu0 %v1424, 64
      %v1866 = vpop.permute.xlu0 %1865
      %1867 = vrot.lane.b32.xlu0 %v1425, 64
      %v1868 = vpop.permute.xlu0 %1867
      %1869 = vrot.lane.b32.xlu0 %v1426, 64
      %v1870 = vpop.permute.xlu0 %1869
      %1871 = vrot.lane.b32.xlu0 %v1427, 64
      %v1872 = vpop.permute.xlu0 %1871
      %1873 = vrot.lane.b32.xlu0 %v1428, 64
      %v1874 = vpop.permute.xlu0 %1873
      %1875 = vrot.lane.b32.xlu0 %v1429, 64
      %v1876 = vpop.permute.xlu0 %1875
      %1877 = vrot.lane.b32.xlu0 %v1430, 64
      %v1878 = vpop.permute.xlu0 %1877
      %1879 = vrot.lane.b32.xlu0 %v1431, 64
      %v1880 = vpop.permute.xlu0 %1879
      %1881 = vrot.lane.b32.xlu0 %v1432, 64
      %v1882 = vpop.permute.xlu0 %1881
      %1883 = vrot.lane.b32.xlu0 %v1433, 64
      %v1884 = vpop.permute.xlu0 %1883
      %1885 = vrot.lane.b32.xlu0 %v1434, 64
      %v1886 = vpop.permute.xlu0 %1885
      %1912 = vrot.lane.b32.xlu0 %v1439, 64
      %v1913 = vpop.permute.xlu0 %1912
      %v1916 = vsel %vm1406, %v1791, 0
      %v1919 = vsel %vm1406, %v1792, 0
      %v1922 = vsel %vm1406, %v1793, 0
      %v1925 = vsel %vm1406, %v1794, 0
      %1927 = vmatprep.subr.mxu0 0.0
      %1928 = vmatpush1.msra.mxu0 %v1840
      %1929 = vmatprep.subr.mxu0 0.0
      %1930 = vmatpush1.msra.mxu0 %v1842
      %1931 = vmatprep.subr.mxu0 0.0
      %1932 = vmatpush1.msra.mxu0 %v1844
      %1933 = vmatprep.subr.mxu0 0.0
      %1934 = vmatpush1.msra.mxu0 %v1846
      %1935 = vmatprep.subr.mxu0 0.0
      %1936 = vmatpush1.msra.mxu0 %v1848
      %1937 = vmatprep.subr.mxu0 0.0
      %1938 = vmatpush1.msra.mxu0 %v1850
      %1939 = vmatprep.subr.mxu0 0.0
      %1940 = vmatpush1.msra.mxu0 %v1852
      %1941 = vmatprep.subr.mxu0 0.0
      %1942 = vmatpush1.msra.mxu0 %v1854
      %1943 = vmatprep.subr.mxu0 0.0
      %1944 = vmatpush1.msra.mxu0 %v1856
      %1945 = vmatprep.subr.mxu0 0.0
      %1946 = vmatpush1.msra.mxu0 %v1858
      %1947 = vmatprep.subr.mxu0 0.0
      %1948 = vmatpush1.msra.mxu0 %v1860
      %1949 = vmatprep.subr.mxu0 0.0
      %1950 = vmatpush1.msra.mxu0 %v1862
      %1951 = vmatprep.subr.mxu0 0.0
      %1952 = vmatpush1.msra.mxu0 %v1864
      %1953 = vmatprep.subr.mxu0 0.0
      %1954 = vmatpush1.msra.mxu0 %v1866
      %1955 = vmatprep.subr.mxu0 0.0
      %1956 = vmatpush1.msra.mxu0 %v1868
      %1957 = vmatprep.subr.mxu0 0.0
      %1958 = vmatpush1.msra.mxu0 %v1870
      %1959 = vmatprep.subr.mxu0 0.0
      %1960 = vmatpush1.msra.mxu0 %v1872
      %1961 = vmatprep.subr.mxu0 0.0
      %1962 = vmatpush1.msra.mxu0 %v1874
      %1963 = vmatprep.subr.mxu0 0.0
      %1964 = vmatpush1.msra.mxu0 %v1876
      %1965 = vmatprep.subr.mxu0 0.0
      %1966 = vmatpush1.msra.mxu0 %v1878
      %1967 = vmatprep.subr.mxu0 0.0
      %1968 = vmatpush1.msra.mxu0 %v1880
      %1969 = vmatprep.subr.mxu0 0.0
      %1970 = vmatpush1.msra.mxu0 %v1882
      %1971 = vmatprep.subr.mxu0 0.0
      %1972 = vmatpush1.msra.mxu0 %v1884
      %1973 = vmatprep.subr.mxu0 0.0
      %1974 = vmatpush1.msra.mxu0 %v1886
      %1975 = vmatprep.subr.mxu0 0.0
      %1976 = vmatpush1.msra.mxu0 0.0
      %1977 = vmatprep.subr.mxu0 0.0
      %1978 = vmatpush1.msra.mxu0 0.0
      %1979 = vmatprep.subr.mxu0 0.0
      %1980 = vmatpush1.msra.mxu0 0.0
      %1981 = vmatprep.subr.mxu0 0.0
      %1982 = vmatpush1.msra.mxu0 0.0
      %1983 = vmatprep.subr.mxu0 0.0
      %1984 = vmatpush1.msra.mxu0 0.0
      %1985 = vmatprep.subr.mxu0 0.0
      %1986 = vmatpush1.msra.mxu0 0.0
      %1987 = vmatprep.subr.mxu0 0.0
      %1988 = vmatpush1.msra.mxu0 0.0
      %1989 = vmatprep.subr.mxu0 0.0
      %1990 = vmatpush1.msra.mxu0 0.0
      %1991 = vmatprep.mubr.f32.mxu0 %v1916
      %1992 = vmatmul.mubr.f32.gmra.mrb[0].mxu0 %v1811
      %v1993 = vpop.f32.mrb[0].mxu0
      %v1994 = vadd.f32 %v1913, %v1993
      %v1995 = vpop.f32.mrb[0].mxu0
      %1996 = vmatprep.mubr.f32.mxu0 %v1919
      %1997 = vmatmul.mubr.f32.gmra.mrb[0].mxu0 %v1812
      %v1998 = vpop.f32.mrb[0].mxu0
      %v1999 = vadd.f32 %v1913, %v1998
      %v2000 = vpop.f32.mrb[0].mxu0
      %2001 = vmatprep.mubr.f32.mxu0 %v1922
      %2002 = vmatmul.mubr.f32.gmra.mrb[0].mxu0 %v1813
      %v2003 = vpop.f32.mrb[0].mxu0
      %v2004 = vadd.f32 %v1913, %v2003
      %v2005 = vpop.f32.mrb[0].mxu0
      %2006 = vmatprep.mubr.f32.mxu0 %v1925
      %2007 = vmatmul.mubr.f32.gmra.mrb[0].mxu0 %v1814
      %v2008 = vpop.f32.mrb[0].mxu0
      %v2009 = vadd.f32 %v1913, %v2008
      %v2010 = vpop.f32.mrb[0].mxu0
      %2011 = vdwg.mxu0
      %v2012 = vtanh.pop %v1994
      %v2013 = vtanh.pop %v1999
      %v2014 = vtanh.pop %v2004
      %v2015 = vtanh.pop %v2009
      %v2016 = vmul.f32 %v1554, %v1205
      %v2017 = vmul.f32 %v1556, %v1207
      %v2018 = vmul.f32 %v1558, %v1209
      %v2019 = vmul.f32 %v1560, %v1211
      %v2020 = vsub.f32 1.0, %v1554
      %v2021 = vsub.f32 1.0, %v1556
      %v2022 = vsub.f32 1.0, %v1558
      %v2023 = vsub.f32 1.0, %v1560
      %2028 = vrot.lane.b32.xlu0 %v2012, 32
      %v2029 = vpop.permute.xlu0 %2028
      %2030 = vrot.lane.b32.xlu0 %v2013, 32
      %v2031 = vpop.permute.xlu0 %2030
      %2032 = vrot.lane.b32.xlu0 %v2014, 32
      %v2033 = vpop.permute.xlu0 %2032
      %2034 = vrot.lane.b32.xlu0 %v2015, 32
      %v2035 = vpop.permute.xlu0 %2034
      %v2040 = vmul.f32 %v2020, %v2029
      %v2041 = vmul.f32 %v2021, %v2031
      %v2042 = vmul.f32 %v2022, %v2033
      %v2043 = vmul.f32 %v2023, %v2035
      %v2044 = vadd.f32 %v2016, %v2040
      %v2045 = vadd.f32 %v2017, %v2041
      %v2046 = vadd.f32 %v2018, %v2042
      %v2047 = vadd.f32 %v2019, %v2043
      %2052 = vrot.lane.b32.xlu0 %v2044, 96
      %v2053 = vpop.permute.xlu0 %2052
      %2054 = vrot.lane.b32.xlu0 %v2045, 96
      %v2055 = vpop.permute.xlu0 %2054
      %2056 = vrot.lane.b32.xlu0 %v2046, 96
      %v2057 = vpop.permute.xlu0 %2056
      %2058 = vrot.lane.b32.xlu0 %v2047, 96
      %v2059 = vpop.permute.xlu0 %2058
      %2064 = vst.msk [vmem:[%s1195] sm:$0xff] %vm331, %v2053
      %2065 = vst.msk [vmem:[%s1195 + $0x8] sm:$0xff] %vm331, %v2055
      %2066 = vst.msk [vmem:[%s1195 + $0x10] sm:$0xff] %vm331, %v2057
      %2067 = vst.msk [vmem:[%s1195 + $0x18] sm:$0xff] %vm331, %v2059
      %v2068 = vld [vmem:[%s5] sm:$0xff]
      %v2069 = vld [vmem:[%s5 + $0x8] sm:$0xff]
      %v2070 = vld [vmem:[%s5 + $0x10] sm:$0xff]
      %v2071 = vld [vmem:[%s5 + $0x18] sm:$0xff]
      %v2072 = vld [vmem:[%s5 + $0x20] sm:$0x1]
      %v2073 = vlaneseq
      %v2074 = vshrl.u32 %v2073, 7
      %v2075 = vsub.s32 0, %v2074
      %v2076 = vrot.slane %v2072, %v2075
      %v2077 = vsel %vm331, %v2053, 0
      %v2079 = vsel %vm331, %v2055, 0
      %v2081 = vsel %vm331, %v2057, 0
      %v2083 = vsel %vm331, %v2059, 0
      %2085 = vmatprep.subr.mxu0 0.0
      %2086 = vmatpush1.msra.mxu0 %v2068
      %2087 = vmatprep.subr.mxu0 0.0
      %2088 = vmatpush1.msra.mxu0 %v2069
      %2089 = vmatprep.subr.mxu0 0.0
      %2090 = vmatpush1.msra.mxu0 %v2070
      %2091 = vmatprep.subr.mxu0 0.0
      %2092 = vmatpush1.msra.mxu0 %v2071
      %2093 = vmatprep.subr.mxu0 0.0
      %2094 = vmatpush1.msra.mxu0 0.0
      %2095 = vmatprep.subr.mxu0 0.0
      %2096 = vmatpush1.msra.mxu0 0.0
      %2097 = vmatprep.subr.mxu0 0.0
      %2098 = vmatpush1.msra.mxu0 0.0
      %2099 = vmatprep.subr.mxu0 0.0
      %2100 = vmatpush1.msra.mxu0 0.0
      %2101 = vmatprep.subr.mxu0 0.0
      %2102 = vmatpush1.msra.mxu0 0.0
      %2103 = vmatprep.subr.mxu0 0.0
      %2104 = vmatpush1.msra.mxu0 0.0
      %2105 = vmatprep.subr.mxu0 0.0
      %2106 = vmatpush1.msra.mxu0 0.0
      %2107 = vmatprep.subr.mxu0 0.0
      %2108 = vmatpush1.msra.mxu0 0.0
      %2109 = vmatprep.subr.mxu0 0.0
      %2110 = vmatpush1.msra.mxu0 0.0
      %2111 = vmatprep.subr.mxu0 0.0
      %2112 = vmatpush1.msra.mxu0 0.0
      %2113 = vmatprep.subr.mxu0 0.0
      %2114 = vmatpush1.msra.mxu0 0.0
      %2115 = vmatprep.subr.mxu0 0.0
      %2116 = vmatpush1.msra.mxu0 0.0
      %2117 = vmatprep.subr.mxu0 0.0
      %2118 = vmatpush1.msra.mxu0 0.0
      %2119 = vmatprep.subr.mxu0 0.0
      %2120 = vmatpush1.msra.mxu0 0.0
      %2121 = vmatprep.subr.mxu0 0.0
      %2122 = vmatpush1.msra.mxu0 0.0
      %2123 = vmatprep.subr.mxu0 0.0
      %2124 = vmatpush1.msra.mxu0 0.0
      %2125 = vmatprep.subr.mxu0 0.0
      %2126 = vmatpush1.msra.mxu0 0.0
      %2127 = vmatprep.subr.mxu0 0.0
      %2128 = vmatpush1.msra.mxu0 0.0
      %2129 = vmatprep.subr.mxu0 0.0
      %2130 = vmatpush1.msra.mxu0 0.0
      %2131 = vmatprep.subr.mxu0 0.0
      %2132 = vmatpush1.msra.mxu0 0.0
      %2133 = vmatprep.subr.mxu0 0.0
      %2134 = vmatpush1.msra.mxu0 0.0
      %2135 = vmatprep.subr.mxu0 0.0
      %2136 = vmatpush1.msra.mxu0 0.0
      %2137 = vmatprep.subr.mxu0 0.0
      %2138 = vmatpush1.msra.mxu0 0.0
      %2139 = vmatprep.subr.mxu0 0.0
      %2140 = vmatpush1.msra.mxu0 0.0
      %2141 = vmatprep.subr.mxu0 0.0
      %2142 = vmatpush1.msra.mxu0 0.0
      %2143 = vmatprep.subr.mxu0 0.0
      %2144 = vmatpush1.msra.mxu0 0.0
      %2145 = vmatprep.subr.mxu0 0.0
      %2146 = vmatpush1.msra.mxu0 0.0
      %2147 = vmatprep.subr.mxu0 0.0
      %2148 = vmatpush1.msra.mxu0 0.0
      %2149 = vmatprep.mubr.f32.mxu0 0.0
      %2150 = vmatmul.mubr.f32.gmra.mrb[0].mxu0 %v2077
      %v2151 = vpop.f32.mrb[0].mxu0
      %v2152 = vadd.f32 %v2076, %v2151
      %v2153 = vpop.f32.mrb[0].mxu0
      %2154 = vmatprep.mubr.f32.mxu0 0.0
      %2155 = vmatmul.mubr.f32.gmra.mrb[0].mxu0 %v2079
      %v2156 = vpop.f32.mrb[0].mxu0
      %v2157 = vadd.f32 %v2076, %v2156
      %v2158 = vpop.f32.mrb[0].mxu0
      %2159 = vmatprep.mubr.f32.mxu0 0.0
      %2160 = vmatmul.mubr.f32.gmra.mrb[0].mxu0 %v2081
      %v2161 = vpop.f32.mrb[0].mxu0
      %v2162 = vadd.f32 %v2076, %v2161
      %v2163 = vpop.f32.mrb[0].mxu0
      %2164 = vmatprep.mubr.f32.mxu0 0.0
      %2165 = vmatmul.mubr.f32.gmra.mrb[0].mxu0 %v2083
      %v2166 = vpop.f32.mrb[0].mxu0
      %v2167 = vadd.f32 %v2076, %v2166
      %v2168 = vpop.f32.mrb[0].mxu0
      %2169 = vdwg.mxu0
      %2170 = vst.msk [vmem:[%s276] sm:$0xff] %vm326, %v2152
      %2171 = vst.msk [vmem:[%s276 + $0x8] sm:$0xff] %vm326, %v2157
      %2172 = vst.msk [vmem:[%s276 + $0x10] sm:$0xff] %vm326, %v2162
      %2173 = vst.msk [vmem:[%s276 + $0x18] sm:$0xff] %vm326, %v2167
      %p2174 = scmp.eq.s32.totalorder %s19, 7
      // Predicated region
      $region49: #{decoder_rollout.1} parent=43 // pred_check
        %p2175 = pneg %p2174
      $region50: #{decoder_rollout.1} parent=43 // pred_check_branch
        %2177 = sbr.rel (%p2175) target = $region52
      $region51: #{decoder_rollout.1} parent=43 // pred_region
        %v2178 = vld [vmem:[#allocation2] sm:$0xff]
        %v2179 = vld [vmem:[#allocation2 + $0x8] sm:$0xff]
        %v2180 = vld [vmem:[#allocation2 + $0x10] sm:$0xff]
        %v2181 = vld [vmem:[#allocation2 + $0x18] sm:$0xff]
        %v2182 = vld [vmem:[#allocation2 + $0x20] sm:$0xff]
        %v2183 = vld [vmem:[#allocation2 + $0x28] sm:$0xff]
        %v2184 = vld [vmem:[#allocation2 + $0x30] sm:$0xff]
        %v2185 = vld [vmem:[#allocation2 + $0x38] sm:$0xff]
        %2186 = vst.msk [vmem:[%s7] sm:$0xff] %vm331, %v2178
        %2187 = vst.msk [vmem:[%s7 + $0x8] sm:$0xff] %vm331, %v2179
        %2188 = vst.msk [vmem:[%s7 + $0x10] sm:$0xff] %vm331, %v2180
        %2189 = vst.msk [vmem:[%s7 + $0x18] sm:$0xff] %vm331, %v2181
        %2190 = vst.msk [vmem:[%s7 + $0x20] sm:$0xff] %vm331, %v2182
        %2191 = vst.msk [vmem:[%s7 + $0x28] sm:$0xff] %vm331, %v2183
        %2192 = vst.msk [vmem:[%s7 + $0x30] sm:$0xff] %vm331, %v2184
        %2193 = vst.msk [vmem:[%s7 + $0x38] sm:$0xff] %vm331, %v2185
      $region52: #{decoder_rollout.1} parent=43 // pred_fallthru
        _
      %p2194 = scmp.lt.s32.totalorder %s19, 7
      %s2195 = scalar_select %p2194, %s19, 7
      %s2196 = smul.addr %s2195, 4
      %s2197 = smul.addr %s2196, 8
      %s2198 = scalar_lea.vmem %s6, %s2197
      // Predicated region
      $region53: #{decoder_rollout.1} parent=43 // pred_check
        %p2199 = pneg %p168
      $region54: #{decoder_rollout.1} parent=43 // pred_check_branch
        %2201 = sbr.rel (%p2199) target = $region56
      $region55: #{decoder_rollout.1} parent=43 // pred_region
        _
      $region56: #{decoder_rollout.1} parent=43 // pred_fallthru
        _
      // Predicated region
      $region57: #{decoder_rollout.1} parent=43 // pred_check
        %p2202 = pneg %p189
      $region58: #{decoder_rollout.1} parent=43 // pred_check_branch
        %2204 = sbr.rel (%p2202) target = $region60
      $region59: #{decoder_rollout.1} parent=43 // pred_region
        _
      $region60: #{decoder_rollout.1} parent=43 // pred_fallthru
        _
      // Predicated region
      $region61: #{decoder_rollout.1} parent=43 // pred_check
        %p2205 = pneg %p189
      $region62: #{decoder_rollout.1} parent=43 // pred_check_branch
        %2207 = sbr.rel (%p2205) target = $region64
      $region63: #{decoder_rollout.1} parent=43 // pred_region
        _
      $region64: #{decoder_rollout.1} parent=43 // pred_fallthru
        _
    $region44: #{decoder_rollout.1} parent=5 // pred_fallthru
      _
    %p2208 = scmp.le.s32.totalorder 2, %s14
    // Predicated region
    $region65: #{decoder_rollout.1} parent=5 // pred_check
      %p2209 = pneg %p2208
    $region66: #{decoder_rollout.1} parent=5 // pred_check_branch
      %2211 = sbr.rel (%p2209) target = $region68
    $region67: #{decoder_rollout.1} parent=5 // pred_region
      %s2212 = ssub.s32 %s14, 2
      // Predicated region
      $region69: #{decoder_rollout.1} parent=67 // pred_check
        %p2213 = pneg %p174
      $region70: #{decoder_rollout.1} parent=67 // pred_check_branch
        %2215 = sbr.rel (%p2213) target = $region72
      $region71: #{decoder_rollout.1} parent=67 // pred_region
        %p2216 = scmp.lt.s32.totalorder %s20, 7
        %s2217 = scalar_select %p2216, %s20, 7
        %s2218 = smul.addr %s2217, 4
        %s2219 = smul.addr %s2218, 8
        %s2220 = scalar_lea.vmem %s6, %s2219
      $region72: #{decoder_rollout.1} parent=67 // pred_fallthru
        _
    $region68: #{decoder_rollout.1} parent=5 // pred_fallthru
      _
  $region6: #{decoder_rollout.1} parent=0 // loop_footer
    %s18 = sadd.s32 1, %s14
  $region7: #{decoder_rollout.1} parent=0 // loop_footer_branch
    %13 = sbr.rel target = $region3
  $region8: #{decoder_rollout.1} parent=0 // loop_exit
    _

</llo_original>
